<compile_context>
chip_gen: v6e
topology: v6e:2x2x1
jax: 0.10.0
libtpu: 0.0.40
codegen_flags: <defaults>
</compile_context>

<pallas_src>
import functools

import numpy as np
import jax
import jax.numpy as jnp
from jax import lax
from jax.experimental import pallas as pl
from jax.experimental.pallas import tpu as pltpu


def _round_up(x, m):
    return (x + m - 1) // m * m


# ----------------------------------------------------------------------------
# Pallas kernel: tiled matmul + optional bias + optional ReLU
# ----------------------------------------------------------------------------
def _matmul_kernel(a_ref, b_ref, *rest, relu, has_bias):
    if has_bias:
        bias_ref, o_ref, acc_ref = rest
    else:
        o_ref, acc_ref = rest
        bias_ref = None

    @pl.when(pl.program_id(2) == 0)
    def _():
        acc_ref[...] = jnp.zeros_like(acc_ref)

    acc_ref[...] += jnp.dot(a_ref[...], b_ref[...],
                            preferred_element_type=jnp.float32)

    @pl.when(pl.program_id(2) == pl.num_programs(2) - 1)
    def _():
        acc = acc_ref[...]
        if has_bias:
            acc = acc + bias_ref[...]          # (1, tn) broadcasts over rows
        if relu:
            acc = jnp.maximum(acc, 0.0)
        o_ref[...] = acc.astype(o_ref.dtype)


def pallas_matmul_bias(a, b, bias=None, relu=False,
                       tm_max=512, tn_max=256, tk_max=512):
    """(M,K) @ (K,N) [+ bias[N]] [-> ReLU], tiled & pipelined on the MXU.

    Inputs are cast to bf16 (f32 accumulation). M/N/K are zero-padded to the
    tile grid so every tile is unmasked and the output store is lane-dense.
    """
    M, K = a.shape
    K2, N = b.shape
    assert K == K2
    has_bias = bias is not None

    tm = min(tm_max, _round_up(M, 16))     # sublane aligned (bf16 packs 16)
    tn = min(tn_max, _round_up(N, 128))    # lane-dense output
    tk = min(tk_max, _round_up(K, 128))
    Mp, Np, Kp = _round_up(M, tm), _round_up(N, tn), _round_up(K, tk)

    a_p = jnp.pad(a.astype(jnp.float32),
                  ((0, Mp - M), (0, Kp - K))).astype(jnp.bfloat16)
    b_p = jnp.pad(b.astype(jnp.float32),
                  ((0, Kp - K), (0, Np - N))).astype(jnp.bfloat16)

    in_specs = [
        pl.BlockSpec((tm, tk), lambda i, j, k: (i, k)),
        pl.BlockSpec((tk, tn), lambda i, j, k: (k, j)),
    ]
    args = [a_p, b_p]
    if has_bias:
        bias_p = jnp.pad(bias.astype(jnp.float32).reshape(1, N),
                         ((0, 0), (0, Np - N)))
        in_specs.append(pl.BlockSpec((1, tn), lambda i, j, k: (0, j)))
        args.append(bias_p)

    out = pl.pallas_call(
        functools.partial(_matmul_kernel, relu=relu, has_bias=has_bias),
        out_shape=jax.ShapeDtypeStruct((Mp, Np), jnp.float32),
        grid_spec=pltpu.PrefetchScalarGridSpec(
            num_scalar_prefetch=0,
            grid=(Mp // tm, Np // tn, Kp // tk),
            in_specs=in_specs,
            out_specs=pl.BlockSpec((tm, tn), lambda i, j, k: (i, j)),
            scratch_shapes=[pltpu.VMEM((tm, tn), jnp.float32)],
        ),
        compiler_params=pltpu.CompilerParams(
            dimension_semantics=("parallel", "parallel", "arbitrary"),
            vmem_limit_bytes=32 * 1024 * 1024,   # fits v5e/v6e/v7x scoped VMEM
        ),
    )(*args)
    return out[:M, :N]


# ----------------------------------------------------------------------------
# Convolution = im2col (glue) + tiled Pallas matmul (hot path)
# ----------------------------------------------------------------------------
def conv2d_nhwc(x, w_oihw, b, stride=1, padding=0, relu=False):
    N, H, W, Cin = x.shape
    Cout, Cin2, KH, KW = w_oihw.shape
    assert Cin == Cin2
    xp = jnp.pad(x, ((0, 0), (padding, padding), (padding, padding), (0, 0)))
    Hp, Wp = H + 2 * padding, W + 2 * padding
    Ho = (Hp - KH) // stride + 1
    Wo = (Wp - KW) // stride + 1
    # TODO(synk): im2col is XLA glue (KH*KW-expanded activation in HBM);
    # in-kernel shifted-matmul accumulation would cut this traffic ~KH*KW x.
    patches = []
    for kh in range(KH):
        for kw in range(KW):
            patches.append(
                xp[:, kh:kh + Ho * stride:stride, kw:kw + Wo * stride:stride, :])
    patches = jnp.concatenate(patches, axis=-1)            # (N,Ho,Wo,KH*KW*Cin)
    a = patches.reshape(N * Ho * Wo, KH * KW * Cin)
    # PyTorch OIHW weight -> (kh, kw, cin, cout) -> im2col matrix
    wmat = jnp.transpose(w_oihw, (2, 3, 1, 0)).reshape(KH * KW * Cin, Cout)
    out = pallas_matmul_bias(a, wmat, b, relu=relu)
    return out.reshape(N, Ho, Wo, Cout)


# ----------------------------------------------------------------------------
# Bilinear upsample (align_corners=False) as two separable Pallas matmuls
# ----------------------------------------------------------------------------
def bilinear_matrix(in_size, out_size):
    if in_size == out_size:
        return np.eye(out_size, dtype=np.float32)
    scale = in_size / out_size
    W = np.zeros((out_size, in_size), dtype=np.float32)
    for i in range(out_size):
        src = max((i + 0.5) * scale - 0.5, 0.0)  # PyTorch half-pixel + clamp
        i0 = min(int(np.floor(src)), in_size - 1)
        i1 = min(i0 + 1, in_size - 1)
        w1 = src - i0
        W[i, i0] += 1.0 - w1
        W[i, i1] += w1
    return W


def bilinear_upsample_nhwc(x, out_h, out_w):
    N, H, W, C = x.shape
    y = x
    if out_h != H:  # skip identity resize entirely
        Wh = jnp.asarray(bilinear_matrix(H, out_h))          # (out_h, H)
        xt = jnp.transpose(y, (1, 0, 2, 3)).reshape(H, N * W * C)
        t = pallas_matmul_bias(Wh, xt)                       # no bias, no relu
        y = jnp.transpose(t.reshape(out_h, N, W, C), (1, 0, 2, 3))
    if out_w != W:
        Hc = y.shape[1]
        Ww = jnp.asarray(bilinear_matrix(W, out_w))          # (out_w, W)
        xt = jnp.transpose(y, (2, 0, 1, 3)).reshape(W, N * Hc * C)
        t = pallas_matmul_bias(Ww, xt)
        y = jnp.transpose(t.reshape(out_w, N, Hc, C), (1, 2, 0, 3))
    return y                                                 # (N,out_h,out_w,C)


# ----------------------------------------------------------------------------
# DeepLabV3 forward
# ----------------------------------------------------------------------------
def deeplabv3_forward(params, x_nchw):
    H, W = x_nchw.shape[-2], x_nchw.shape[-1]
    x = jnp.transpose(x_nchw, (0, 2, 3, 1)).astype(jnp.float32)  # NCHW -> NHWC

    # backbone -> OrderedDict with "out"
    f = conv2d_nhwc(x, params["b1_w"], params["b1_b"], stride=2, padding=1, relu=True)
    f = conv2d_nhwc(f, params["b2_w"], params["b2_b"], stride=2, padding=1, relu=True)
    features = {"out": f}

    # classifier on features["out"]
    y = conv2d_nhwc(features["out"], params["c1_w"], params["c1_b"],
                    stride=1, padding=1, relu=True)
    y = conv2d_nhwc(y, params["c2_w"], params["c2_b"],
                    stride=1, padding=0, relu=False)

    # F.interpolate(..., size=input_shape, mode='bilinear', align_corners=False)
    y = bilinear_upsample_nhwc(y, H, W)

    out_nchw = jnp.transpose(y, (0, 3, 1, 2))      # NHWC -> NCHW
    # TODO(synk): aux_classifier branch omitted (aux_classifier=None here).
    return {"out": out_nchw}


# ----------------------------------------------------------------------------
# Pure-JAX reference (numerical sanity check of the Pallas path)
# ----------------------------------------------------------------------------
def ref_forward(params, x_nchw):
    def conv(x, w, b, stride, pad, relu):
        y = lax.conv_general_dilated(
            x, w, (stride, stride), [(pad, pad), (pad, pad)],
            dimension_numbers=("NCHW", "OIHW", "NCHW"))
        y = y + b[None, :, None, None]
        return jnp.maximum(y, 0.0) if relu else y

    f = conv(x_nchw, params["b1_w"], params["b1_b"], 2, 1, True)
    f = conv(f, params["b2_w"], params["b2_b"], 2, 1, True)
    y = conv(f, params["c1_w"], params["c1_b"], 1, 1, True)
    y = conv(y, params["c2_w"], params["c2_b"], 1, 0, False)
    H, W = x_nchw.shape[-2], x_nchw.shape[-1]
    Wh = jnp.asarray(bilinear_matrix(y.shape[2], H))
    Ww = jnp.asarray(bilinear_matrix(y.shape[3], W))
    y = jnp.einsum("ih,nchw->nciw", Wh, y)
    y = jnp.einsum("jw,nciw->ncij", Ww, y)
    return {"out": y}


# ----------------------------------------------------------------------------
# Deterministic parameter init
# ----------------------------------------------------------------------------
def init_params(key, cin, num_classes):
    ks = jax.random.split(key, 8)

    def conv_w(k, cout, cin_, kh, kw):
        fan_in = cin_ * kh * kw
        return jax.random.normal(k, (cout, cin_, kh, kw), jnp.float32) / np.sqrt(fan_in)

    return {
        "b1_w": conv_w(ks[0], 8, cin, 3, 3),
        "b1_b": jax.random.normal(ks[1], (8,), jnp.float32) * 0.05,
        "b2_w": conv_w(ks[2], 16, 8, 3, 3),
        "b2_b": jax.random.normal(ks[3], (16,), jnp.float32) * 0.05,
        "c1_w": conv_w(ks[4], 16, 16, 3, 3),
        "c1_b": jax.random.normal(ks[5], (16,), jnp.float32) * 0.05,
        "c2_w": conv_w(ks[6], num_classes, 16, 1, 1),
        "c2_b": jax.random.normal(ks[7], (num_classes,), jnp.float32) * 0.05,
    }


if __name__ == "__main__":
    key = jax.random.PRNGKey(0)
    k_x, k_p = jax.random.split(key)

    N, C, H, W = 2, 4, 16, 16
    num_classes = 3
    x = jax.random.normal(k_x, (N, C, H, W), jnp.float32)
    params = init_params(k_p, C, num_classes)

    fwd = jax.jit(deeplabv3_forward)
    out = fwd(params, x)
    jax.block_until_ready(out["out"])
    assert out["out"].shape == (N, num_classes, H, W)

    ref = ref_forward(params, x)
    jax.block_until_ready(ref["out"])
    # bf16 MXU inputs with f32 accumulation -> slightly looser tolerance than f32.
    np.testing.assert_allclose(np.asarray(out["out"]), np.asarray(ref["out"]),
                               rtol=3e-2, atol=3e-2)

    print("KERNEL_OK")
</pallas_src>

<mosaic_0001>
module attributes {stable_mosaic.version = 11 : i64} {
  func.func @_matmul_kernel(%arg0: i32, %arg1: i32, %arg2: i32, %arg3: memref<128x128xbf16, #tpu.memory_space<vmem>>, %arg4: memref<128x128xbf16, #tpu.memory_space<vmem>>, %arg5: memref<1x128xf32, #tpu.memory_space<vmem>>, %arg6: memref<128x128xf32, #tpu.memory_space<vmem>>, %arg7: memref<128x128xf32, #tpu.memory_space<vmem>>) attributes {dimension_semantics = [#tpu.dimension_semantics<parallel>, #tpu.dimension_semantics<parallel>, #tpu.dimension_semantics<arbitrary>], iteration_bounds = array<i64: 1, 1, 1>, scalar_prefetch = 0 : i64, scratch_operands = 1 : i64, tpu.core_type = #tpu.core_type<tc>, window_params = [{transform_indices = @transform_0, window_bounds = array<i64: 128, 128>}, {transform_indices = @transform_1, window_bounds = array<i64: 128, 128>}, {transform_indices = @transform_2, window_bounds = array<i64: 1, 128>}, {transform_indices = @transform_3, window_bounds = array<i64: 128, 128>}]} {
    %c0_i32 = arith.constant 0 : i32
    %0 = arith.cmpi eq, %arg2, %c0_i32 : i32
    %1 = arith.extui %0 : i1 to i32
    %c0_i32_0 = arith.constant 0 : i32
    %2 = arith.cmpi ne, %1, %c0_i32_0 : i32
    scf.if %2 {
      %cst_10 = arith.constant 0.000000e+00 : f32
      %12 = vector.broadcast %cst_10 : f32 to vector<128x128xf32>
      %c0_11 = arith.constant 0 : index
      %c0_12 = arith.constant 0 : index
      %13 = vector.load %arg7[%c0_11, %c0_12] : memref<128x128xf32, #tpu.memory_space<vmem>>, vector<128x128xf32>
      tpu.vector_store %arg7[%c0_11, %c0_12], %12 {strides = array<i32>} : memref<128x128xf32, #tpu.memory_space<vmem>>, vector<128x128xf32>,
    } else {
    }
    %c0 = arith.constant 0 : index
    %c0_1 = arith.constant 0 : index
    %3 = vector.load %arg7[%c0, %c0_1] : memref<128x128xf32, #tpu.memory_space<vmem>>, vector<128x128xf32>
    %c0_2 = arith.constant 0 : index
    %c0_3 = arith.constant 0 : index
    %4 = vector.load %arg3[%c0_2, %c0_3] : memref<128x128xbf16, #tpu.memory_space<vmem>>, vector<128x128xbf16>
    %c0_4 = arith.constant 0 : index
    %c0_5 = arith.constant 0 : index
    %5 = vector.load %arg4[%c0_4, %c0_5] : memref<128x128xbf16, #tpu.memory_space<vmem>>, vector<128x128xbf16>
    %cst = arith.constant dense<0.000000e+00> : vector<128x128xf32>
    %6 = tpu.matmul %4, %5, %cst {dimension_numbers = #tpu.dot_dimension_numbers<[1], [0], [0], [1], [0, 0, 1, 1], [], []>} : vector<128x128xbf16>, vector<128x128xbf16>, vector<128x128xf32> -> vector<128x128xf32>
    %7 = arith.addf %3, %6 : vector<128x128xf32>
    %c0_6 = arith.constant 0 : index
    %c0_7 = arith.constant 0 : index
    %8 = vector.load %arg7[%c0_6, %c0_7] : memref<128x128xf32, #tpu.memory_space<vmem>>, vector<128x128xf32>
    tpu.vector_store %arg7[%c0_6, %c0_7], %7 {strides = array<i32>} : memref<128x128xf32, #tpu.memory_space<vmem>>, vector<128x128xf32>,
    %c0_i32_8 = arith.constant 0 : i32
    %9 = arith.cmpi eq, %arg2, %c0_i32_8 : i32
    %10 = arith.extui %9 : i1 to i32
    %c0_i32_9 = arith.constant 0 : i32
    %11 = arith.cmpi ne, %10, %c0_i32_9 : i32
    scf.if %11 {
      %c0_10 = arith.constant 0 : index
      %c0_11 = arith.constant 0 : index
      %12 = vector.load %arg7[%c0_10, %c0_11] : memref<128x128xf32, #tpu.memory_space<vmem>>, vector<128x128xf32>
      %c0_12 = arith.constant 0 : index
      %c0_13 = arith.constant 0 : index
      %13 = vector.load %arg5[%c0_12, %c0_13] : memref<1x128xf32, #tpu.memory_space<vmem>>, vector<1x128xf32>
      %14 = vector.broadcast %13 : vector<1x128xf32> to vector<128x128xf32>
      %15 = arith.addf %12, %14 : vector<128x128xf32>
      %cst_14 = arith.constant 0.000000e+00 : f32
      %16 = vector.broadcast %cst_14 : f32 to vector<128x128xf32>
      %17 = arith.maximumf %15, %16 : vector<128x128xf32>
      %c0_15 = arith.constant 0 : index
      %c0_16 = arith.constant 0 : index
      %18 = vector.load %arg6[%c0_15, %c0_16] : memref<128x128xf32, #tpu.memory_space<vmem>>, vector<128x128xf32>
      tpu.vector_store %arg6[%c0_15, %c0_16], %17 {strides = array<i32>} : memref<128x128xf32, #tpu.memory_space<vmem>>, vector<128x128xf32>,
    } else {
    }
    return
  }
  func.func @transform_0(%arg0: i32, %arg1: i32, %arg2: i32) -> (i32, i32) {
    %c0_i32 = arith.constant 0 : i32
    return %arg0, %arg2 : i32, i32
  }
  func.func @transform_1(%arg0: i32, %arg1: i32, %arg2: i32) -> (i32, i32) {
    %c0_i32 = arith.constant 0 : i32
    return %arg2, %arg1 : i32, i32
  }
  func.func @transform_2(%arg0: i32, %arg1: i32, %arg2: i32) -> (i32, i32) {
    %c0_i32 = arith.constant 0 : i32
    %c0_i32_0 = arith.constant 0 : i32
    return %c0_i32, %arg1 : i32, i32
  }
  func.func @transform_3(%arg0: i32, %arg1: i32, %arg2: i32) -> (i32, i32) {
    %c0_i32 = arith.constant 0 : i32
    return %arg0, %arg1 : i32, i32
  }
}

module attributes {stable_mosaic.version = 11 : i64} {
  func.func @_matmul_kernel(%arg0: i32, %arg1: i32, %arg2: i32, %arg3: memref<32x128xbf16, #tpu.memory_space<vmem>>, %arg4: memref<128x128xbf16, #tpu.memory_space<vmem>>, %arg5: memref<1x128xf32, #tpu.memory_space<vmem>>, %arg6: memref<32x128xf32, #tpu.memory_space<vmem>>, %arg7: memref<32x128xf32, #tpu.memory_space<vmem>>) attributes {dimension_semantics = [#tpu.dimension_semantics<parallel>, #tpu.dimension_semantics<parallel>, #tpu.dimension_semantics<arbitrary>], iteration_bounds = array<i64: 1, 1, 1>, scalar_prefetch = 0 : i64, scratch_operands = 1 : i64, tpu.core_type = #tpu.core_type<tc>, window_params = [{transform_indices = @transform_0, window_bounds = array<i64: 32, 128>}, {transform_indices = @transform_1, window_bounds = array<i64: 128, 128>}, {transform_indices = @transform_2, window_bounds = array<i64: 1, 128>}, {transform_indices = @transform_3, window_bounds = array<i64: 32, 128>}]} {
    %c0_i32 = arith.constant 0 : i32
    %0 = arith.cmpi eq, %arg2, %c0_i32 : i32
    %1 = arith.extui %0 : i1 to i32
    %c0_i32_0 = arith.constant 0 : i32
    %2 = arith.cmpi ne, %1, %c0_i32_0 : i32
    scf.if %2 {
      %cst_10 = arith.constant 0.000000e+00 : f32
      %12 = vector.broadcast %cst_10 : f32 to vector<32x128xf32>
      %c0_11 = arith.constant 0 : index
      %c0_12 = arith.constant 0 : index
      %13 = vector.load %arg7[%c0_11, %c0_12] : memref<32x128xf32, #tpu.memory_space<vmem>>, vector<32x128xf32>
      tpu.vector_store %arg7[%c0_11, %c0_12], %12 {strides = array<i32>} : memref<32x128xf32, #tpu.memory_space<vmem>>, vector<32x128xf32>,
    } else {
    }
    %c0 = arith.constant 0 : index
    %c0_1 = arith.constant 0 : index
    %3 = vector.load %arg7[%c0, %c0_1] : memref<32x128xf32, #tpu.memory_space<vmem>>, vector<32x128xf32>
    %c0_2 = arith.constant 0 : index
    %c0_3 = arith.constant 0 : index
    %4 = vector.load %arg3[%c0_2, %c0_3] : memref<32x128xbf16, #tpu.memory_space<vmem>>, vector<32x128xbf16>
    %c0_4 = arith.constant 0 : index
    %c0_5 = arith.constant 0 : index
    %5 = vector.load %arg4[%c0_4, %c0_5] : memref<128x128xbf16, #tpu.memory_space<vmem>>, vector<128x128xbf16>
    %cst = arith.constant dense<0.000000e+00> : vector<32x128xf32>
    %6 = tpu.matmul %4, %5, %cst {dimension_numbers = #tpu.dot_dimension_numbers<[1], [0], [0], [1], [0, 0, 1, 1], [], []>} : vector<32x128xbf16>, vector<128x128xbf16>, vector<32x128xf32> -> vector<32x128xf32>
    %7 = arith.addf %3, %6 : vector<32x128xf32>
    %c0_6 = arith.constant 0 : index
    %c0_7 = arith.constant 0 : index
    %8 = vector.load %arg7[%c0_6, %c0_7] : memref<32x128xf32, #tpu.memory_space<vmem>>, vector<32x128xf32>
    tpu.vector_store %arg7[%c0_6, %c0_7], %7 {strides = array<i32>} : memref<32x128xf32, #tpu.memory_space<vmem>>, vector<32x128xf32>,
    %c0_i32_8 = arith.constant 0 : i32
    %9 = arith.cmpi eq, %arg2, %c0_i32_8 : i32
    %10 = arith.extui %9 : i1 to i32
    %c0_i32_9 = arith.constant 0 : i32
    %11 = arith.cmpi ne, %10, %c0_i32_9 : i32
    scf.if %11 {
      %c0_10 = arith.constant 0 : index
      %c0_11 = arith.constant 0 : index
      %12 = vector.load %arg7[%c0_10, %c0_11] : memref<32x128xf32, #tpu.memory_space<vmem>>, vector<32x128xf32>
      %c0_12 = arith.constant 0 : index
      %c0_13 = arith.constant 0 : index
      %13 = vector.load %arg5[%c0_12, %c0_13] : memref<1x128xf32, #tpu.memory_space<vmem>>, vector<1x128xf32>
      %14 = vector.broadcast %13 : vector<1x128xf32> to vector<32x128xf32>
      %15 = arith.addf %12, %14 : vector<32x128xf32>
      %cst_14 = arith.constant 0.000000e+00 : f32
      %16 = vector.broadcast %cst_14 : f32 to vector<32x128xf32>
      %17 = arith.maximumf %15, %16 : vector<32x128xf32>
      %c0_15 = arith.constant 0 : index
      %c0_16 = arith.constant 0 : index
      %18 = vector.load %arg6[%c0_15, %c0_16] : memref<32x128xf32, #tpu.memory_space<vmem>>, vector<32x128xf32>
      tpu.vector_store %arg6[%c0_15, %c0_16], %17 {strides = array<i32>} : memref<32x128xf32, #tpu.memory_space<vmem>>, vector<32x128xf32>,
    } else {
    }
    return
  }
  func.func @transform_0(%arg0: i32, %arg1: i32, %arg2: i32) -> (i32, i32) {
    %c0_i32 = arith.constant 0 : i32
    return %arg0, %arg2 : i32, i32
  }
  func.func @transform_1(%arg0: i32, %arg1: i32, %arg2: i32) -> (i32, i32) {
    %c0_i32 = arith.constant 0 : i32
    return %arg2, %arg1 : i32, i32
  }
  func.func @transform_2(%arg0: i32, %arg1: i32, %arg2: i32) -> (i32, i32) {
    %c0_i32 = arith.constant 0 : i32
    %c0_i32_0 = arith.constant 0 : i32
    return %c0_i32, %arg1 : i32, i32
  }
  func.func @transform_3(%arg0: i32, %arg1: i32, %arg2: i32) -> (i32, i32) {
    %c0_i32 = arith.constant 0 : i32
    return %arg0, %arg1 : i32, i32
  }
}

module attributes {stable_mosaic.version = 11 : i64} {
  func.func @_matmul_kernel(%arg0: i32, %arg1: i32, %arg2: i32, %arg3: memref<32x256xbf16, #tpu.memory_space<vmem>>, %arg4: memref<256x128xbf16, #tpu.memory_space<vmem>>, %arg5: memref<1x128xf32, #tpu.memory_space<vmem>>, %arg6: memref<32x128xf32, #tpu.memory_space<vmem>>, %arg7: memref<32x128xf32, #tpu.memory_space<vmem>>) attributes {dimension_semantics = [#tpu.dimension_semantics<parallel>, #tpu.dimension_semantics<parallel>, #tpu.dimension_semantics<arbitrary>], iteration_bounds = array<i64: 1, 1, 1>, scalar_prefetch = 0 : i64, scratch_operands = 1 : i64, tpu.core_type = #tpu.core_type<tc>, window_params = [{transform_indices = @transform_0, window_bounds = array<i64: 32, 256>}, {transform_indices = @transform_1, window_bounds = array<i64: 256, 128>}, {transform_indices = @transform_2, window_bounds = array<i64: 1, 128>}, {transform_indices = @transform_3, window_bounds = array<i64: 32, 128>}]} {
    %c0_i32 = arith.constant 0 : i32
    %0 = arith.cmpi eq, %arg2, %c0_i32 : i32
    %1 = arith.extui %0 : i1 to i32
    %c0_i32_0 = arith.constant 0 : i32
    %2 = arith.cmpi ne, %1, %c0_i32_0 : i32
    scf.if %2 {
      %cst_10 = arith.constant 0.000000e+00 : f32
      %12 = vector.broadcast %cst_10 : f32 to vector<32x128xf32>
      %c0_11 = arith.constant 0 : index
      %c0_12 = arith.constant 0 : index
      %13 = vector.load %arg7[%c0_11, %c0_12] : memref<32x128xf32, #tpu.memory_space<vmem>>, vector<32x128xf32>
      tpu.vector_store %arg7[%c0_11, %c0_12], %12 {strides = array<i32>} : memref<32x128xf32, #tpu.memory_space<vmem>>, vector<32x128xf32>,
    } else {
    }
    %c0 = arith.constant 0 : index
    %c0_1 = arith.constant 0 : index
    %3 = vector.load %arg7[%c0, %c0_1] : memref<32x128xf32, #tpu.memory_space<vmem>>, vector<32x128xf32>
    %c0_2 = arith.constant 0 : index
    %c0_3 = arith.constant 0 : index
    %4 = vector.load %arg3[%c0_2, %c0_3] : memref<32x256xbf16, #tpu.memory_space<vmem>>, vector<32x256xbf16>
    %c0_4 = arith.constant 0 : index
    %c0_5 = arith.constant 0 : index
    %5 = vector.load %arg4[%c0_4, %c0_5] : memref<256x128xbf16, #tpu.memory_space<vmem>>, vector<256x128xbf16>
    %cst = arith.constant dense<0.000000e+00> : vector<32x128xf32>
    %6 = tpu.matmul %4, %5, %cst {dimension_numbers = #tpu.dot_dimension_numbers<[1], [0], [0], [1], [0, 0, 1, 1], [], []>} : vector<32x256xbf16>, vector<256x128xbf16>, vector<32x128xf32> -> vector<32x128xf32>
    %7 = arith.addf %3, %6 : vector<32x128xf32>
    %c0_6 = arith.constant 0 : index
    %c0_7 = arith.constant 0 : index
    %8 = vector.load %arg7[%c0_6, %c0_7] : memref<32x128xf32, #tpu.memory_space<vmem>>, vector<32x128xf32>
    tpu.vector_store %arg7[%c0_6, %c0_7], %7 {strides = array<i32>} : memref<32x128xf32, #tpu.memory_space<vmem>>, vector<32x128xf32>,
    %c0_i32_8 = arith.constant 0 : i32
    %9 = arith.cmpi eq, %arg2, %c0_i32_8 : i32
    %10 = arith.extui %9 : i1 to i32
    %c0_i32_9 = arith.constant 0 : i32
    %11 = arith.cmpi ne, %10, %c0_i32_9 : i32
    scf.if %11 {
      %c0_10 = arith.constant 0 : index
      %c0_11 = arith.constant 0 : index
      %12 = vector.load %arg7[%c0_10, %c0_11] : memref<32x128xf32, #tpu.memory_space<vmem>>, vector<32x128xf32>
      %c0_12 = arith.constant 0 : index
      %c0_13 = arith.constant 0 : index
      %13 = vector.load %arg5[%c0_12, %c0_13] : memref<1x128xf32, #tpu.memory_space<vmem>>, vector<1x128xf32>
      %14 = vector.broadcast %13 : vector<1x128xf32> to vector<32x128xf32>
      %15 = arith.addf %12, %14 : vector<32x128xf32>
      %cst_14 = arith.constant 0.000000e+00 : f32
      %16 = vector.broadcast %cst_14 : f32 to vector<32x128xf32>
      %17 = arith.maximumf %15, %16 : vector<32x128xf32>
      %c0_15 = arith.constant 0 : index
      %c0_16 = arith.constant 0 : index
      %18 = vector.load %arg6[%c0_15, %c0_16] : memref<32x128xf32, #tpu.memory_space<vmem>>, vector<32x128xf32>
      tpu.vector_store %arg6[%c0_15, %c0_16], %17 {strides = array<i32>} : memref<32x128xf32, #tpu.memory_space<vmem>>, vector<32x128xf32>,
    } else {
    }
    return
  }
  func.func @transform_0(%arg0: i32, %arg1: i32, %arg2: i32) -> (i32, i32) {
    %c0_i32 = arith.constant 0 : i32
    return %arg0, %arg2 : i32, i32
  }
  func.func @transform_1(%arg0: i32, %arg1: i32, %arg2: i32) -> (i32, i32) {
    %c0_i32 = arith.constant 0 : i32
    return %arg2, %arg1 : i32, i32
  }
  func.func @transform_2(%arg0: i32, %arg1: i32, %arg2: i32) -> (i32, i32) {
    %c0_i32 = arith.constant 0 : i32
    %c0_i32_0 = arith.constant 0 : i32
    return %c0_i32, %arg1 : i32, i32
  }
  func.func @transform_3(%arg0: i32, %arg1: i32, %arg2: i32) -> (i32, i32) {
    %c0_i32 = arith.constant 0 : i32
    return %arg0, %arg1 : i32, i32
  }
}

module attributes {stable_mosaic.version = 11 : i64} {
  func.func @_matmul_kernel(%arg0: i32, %arg1: i32, %arg2: i32, %arg3: memref<32x128xbf16, #tpu.memory_space<vmem>>, %arg4: memref<128x128xbf16, #tpu.memory_space<vmem>>, %arg5: memref<1x128xf32, #tpu.memory_space<vmem>>, %arg6: memref<32x128xf32, #tpu.memory_space<vmem>>, %arg7: memref<32x128xf32, #tpu.memory_space<vmem>>) attributes {dimension_semantics = [#tpu.dimension_semantics<parallel>, #tpu.dimension_semantics<parallel>, #tpu.dimension_semantics<arbitrary>], iteration_bounds = array<i64: 1, 1, 1>, scalar_prefetch = 0 : i64, scratch_operands = 1 : i64, tpu.core_type = #tpu.core_type<tc>, window_params = [{transform_indices = @transform_0, window_bounds = array<i64: 32, 128>}, {transform_indices = @transform_1, window_bounds = array<i64: 128, 128>}, {transform_indices = @transform_2, window_bounds = array<i64: 1, 128>}, {transform_indices = @transform_3, window_bounds = array<i64: 32, 128>}]} {
    %c0_i32 = arith.constant 0 : i32
    %0 = arith.cmpi eq, %arg2, %c0_i32 : i32
    %1 = arith.extui %0 : i1 to i32
    %c0_i32_0 = arith.constant 0 : i32
    %2 = arith.cmpi ne, %1, %c0_i32_0 : i32
    scf.if %2 {
      %cst_10 = arith.constant 0.000000e+00 : f32
      %12 = vector.broadcast %cst_10 : f32 to vector<32x128xf32>
      %c0_11 = arith.constant 0 : index
      %c0_12 = arith.constant 0 : index
      %13 = vector.load %arg7[%c0_11, %c0_12] : memref<32x128xf32, #tpu.memory_space<vmem>>, vector<32x128xf32>
      tpu.vector_store %arg7[%c0_11, %c0_12], %12 {strides = array<i32>} : memref<32x128xf32, #tpu.memory_space<vmem>>, vector<32x128xf32>,
    } else {
    }
    %c0 = arith.constant 0 : index
    %c0_1 = arith.constant 0 : index
    %3 = vector.load %arg7[%c0, %c0_1] : memref<32x128xf32, #tpu.memory_space<vmem>>, vector<32x128xf32>
    %c0_2 = arith.constant 0 : index
    %c0_3 = arith.constant 0 : index
    %4 = vector.load %arg3[%c0_2, %c0_3] : memref<32x128xbf16, #tpu.memory_space<vmem>>, vector<32x128xbf16>
    %c0_4 = arith.constant 0 : index
    %c0_5 = arith.constant 0 : index
    %5 = vector.load %arg4[%c0_4, %c0_5] : memref<128x128xbf16, #tpu.memory_space<vmem>>, vector<128x128xbf16>
    %cst = arith.constant dense<0.000000e+00> : vector<32x128xf32>
    %6 = tpu.matmul %4, %5, %cst {dimension_numbers = #tpu.dot_dimension_numbers<[1], [0], [0], [1], [0, 0, 1, 1], [], []>} : vector<32x128xbf16>, vector<128x128xbf16>, vector<32x128xf32> -> vector<32x128xf32>
    %7 = arith.addf %3, %6 : vector<32x128xf32>
    %c0_6 = arith.constant 0 : index
    %c0_7 = arith.constant 0 : index
    %8 = vector.load %arg7[%c0_6, %c0_7] : memref<32x128xf32, #tpu.memory_space<vmem>>, vector<32x128xf32>
    tpu.vector_store %arg7[%c0_6, %c0_7], %7 {strides = array<i32>} : memref<32x128xf32, #tpu.memory_space<vmem>>, vector<32x128xf32>,
    %c0_i32_8 = arith.constant 0 : i32
    %9 = arith.cmpi eq, %arg2, %c0_i32_8 : i32
    %10 = arith.extui %9 : i1 to i32
    %c0_i32_9 = arith.constant 0 : i32
    %11 = arith.cmpi ne, %10, %c0_i32_9 : i32
    scf.if %11 {
      %c0_10 = arith.constant 0 : index
      %c0_11 = arith.constant 0 : index
      %12 = vector.load %arg7[%c0_10, %c0_11] : memref<32x128xf32, #tpu.memory_space<vmem>>, vector<32x128xf32>
      %c0_12 = arith.constant 0 : index
      %c0_13 = arith.constant 0 : index
      %13 = vector.load %arg5[%c0_12, %c0_13] : memref<1x128xf32, #tpu.memory_space<vmem>>, vector<1x128xf32>
      %14 = vector.broadcast %13 : vector<1x128xf32> to vector<32x128xf32>
      %15 = arith.addf %12, %14 : vector<32x128xf32>
      %c0_14 = arith.constant 0 : index
      %c0_15 = arith.constant 0 : index
      %16 = vector.load %arg6[%c0_14, %c0_15] : memref<32x128xf32, #tpu.memory_space<vmem>>, vector<32x128xf32>
      tpu.vector_store %arg6[%c0_14, %c0_15], %15 {strides = array<i32>} : memref<32x128xf32, #tpu.memory_space<vmem>>, vector<32x128xf32>,
    } else {
    }
    return
  }
  func.func @transform_0(%arg0: i32, %arg1: i32, %arg2: i32) -> (i32, i32) {
    %c0_i32 = arith.constant 0 : i32
    return %arg0, %arg2 : i32, i32
  }
  func.func @transform_1(%arg0: i32, %arg1: i32, %arg2: i32) -> (i32, i32) {
    %c0_i32 = arith.constant 0 : i32
    return %arg2, %arg1 : i32, i32
  }
  func.func @transform_2(%arg0: i32, %arg1: i32, %arg2: i32) -> (i32, i32) {
    %c0_i32 = arith.constant 0 : i32
    %c0_i32_0 = arith.constant 0 : i32
    return %c0_i32, %arg1 : i32, i32
  }
  func.func @transform_3(%arg0: i32, %arg1: i32, %arg2: i32) -> (i32, i32) {
    %c0_i32 = arith.constant 0 : i32
    return %arg0, %arg1 : i32, i32
  }
}

module attributes {stable_mosaic.version = 11 : i64} {
  func.func @_matmul_kernel(%arg0: i32, %arg1: i32, %arg2: i32, %arg3: memref<16x128xbf16, #tpu.memory_space<vmem>>, %arg4: memref<128x128xbf16, #tpu.memory_space<vmem>>, %arg5: memref<16x128xf32, #tpu.memory_space<vmem>>, %arg6: memref<16x128xf32, #tpu.memory_space<vmem>>) attributes {dimension_semantics = [#tpu.dimension_semantics<parallel>, #tpu.dimension_semantics<parallel>, #tpu.dimension_semantics<arbitrary>], iteration_bounds = array<i64: 1, 1, 1>, scalar_prefetch = 0 : i64, scratch_operands = 1 : i64, tpu.core_type = #tpu.core_type<tc>, window_params = [{transform_indices = @transform_0, window_bounds = array<i64: 16, 128>}, {transform_indices = @transform_1, window_bounds = array<i64: 128, 128>}, {transform_indices = @transform_2, window_bounds = array<i64: 16, 128>}]} {
    %c0_i32 = arith.constant 0 : i32
    %0 = arith.cmpi eq, %arg2, %c0_i32 : i32
    %1 = arith.extui %0 : i1 to i32
    %c0_i32_0 = arith.constant 0 : i32
    %2 = arith.cmpi ne, %1, %c0_i32_0 : i32
    scf.if %2 {
      %cst_10 = arith.constant 0.000000e+00 : f32
      %12 = vector.broadcast %cst_10 : f32 to vector<16x128xf32>
      %c0_11 = arith.constant 0 : index
      %c0_12 = arith.constant 0 : index
      %13 = vector.load %arg6[%c0_11, %c0_12] : memref<16x128xf32, #tpu.memory_space<vmem>>, vector<16x128xf32>
      tpu.vector_store %arg6[%c0_11, %c0_12], %12 {strides = array<i32>} : memref<16x128xf32, #tpu.memory_space<vmem>>, vector<16x128xf32>,
    } else {
    }
    %c0 = arith.constant 0 : index
    %c0_1 = arith.constant 0 : index
    %3 = vector.load %arg6[%c0, %c0_1] : memref<16x128xf32, #tpu.memory_space<vmem>>, vector<16x128xf32>
    %c0_2 = arith.constant 0 : index
    %c0_3 = arith.constant 0 : index
    %4 = vector.load %arg3[%c0_2, %c0_3] : memref<16x128xbf16, #tpu.memory_space<vmem>>, vector<16x128xbf16>
    %c0_4 = arith.constant 0 : index
    %c0_5 = arith.constant 0 : index
    %5 = vector.load %arg4[%c0_4, %c0_5] : memref<128x128xbf16, #tpu.memory_space<vmem>>, vector<128x128xbf16>
    %cst = arith.constant dense<0.000000e+00> : vector<16x128xf32>
    %6 = tpu.matmul %4, %5, %cst {dimension_numbers = #tpu.dot_dimension_numbers<[1], [0], [0], [1], [0, 0, 1, 1], [], []>} : vector<16x128xbf16>, vector<128x128xbf16>, vector<16x128xf32> -> vector<16x128xf32>
    %7 = arith.addf %3, %6 : vector<16x128xf32>
    %c0_6 = arith.constant 0 : index
    %c0_7 = arith.constant 0 : index
    %8 = vector.load %arg6[%c0_6, %c0_7] : memref<16x128xf32, #tpu.memory_space<vmem>>, vector<16x128xf32>
    tpu.vector_store %arg6[%c0_6, %c0_7], %7 {strides = array<i32>} : memref<16x128xf32, #tpu.memory_space<vmem>>, vector<16x128xf32>,
    %c0_i32_8 = arith.constant 0 : i32
    %9 = arith.cmpi eq, %arg2, %c0_i32_8 : i32
    %10 = arith.extui %9 : i1 to i32
    %c0_i32_9 = arith.constant 0 : i32
    %11 = arith.cmpi ne, %10, %c0_i32_9 : i32
    scf.if %11 {
      %c0_10 = arith.constant 0 : index
      %c0_11 = arith.constant 0 : index
      %12 = vector.load %arg6[%c0_10, %c0_11] : memref<16x128xf32, #tpu.memory_space<vmem>>, vector<16x128xf32>
      %c0_12 = arith.constant 0 : index
      %c0_13 = arith.constant 0 : index
      %13 = vector.load %arg5[%c0_12, %c0_13] : memref<16x128xf32, #tpu.memory_space<vmem>>, vector<16x128xf32>
      tpu.vector_store %arg5[%c0_12, %c0_13], %12 {strides = array<i32>} : memref<16x128xf32, #tpu.memory_space<vmem>>, vector<16x128xf32>,
    } else {
    }
    return
  }
  func.func @transform_0(%arg0: i32, %arg1: i32, %arg2: i32) -> (i32, i32) {
    %c0_i32 = arith.constant 0 : i32
    return %arg0, %arg2 : i32, i32
  }
  func.func @transform_1(%arg0: i32, %arg1: i32, %arg2: i32) -> (i32, i32) {
    %c0_i32 = arith.constant 0 : i32
    return %arg2, %arg1 : i32, i32
  }
  func.func @transform_2(%arg0: i32, %arg1: i32, %arg2: i32) -> (i32, i32) {
    %c0_i32 = arith.constant 0 : i32
    return %arg0, %arg1 : i32, i32
  }
}

</mosaic_0001>

<llo_original>
// kernel: deeplabv3_forward.6
$region0: #{deeplabv3_forward.6}
  #allocation0 [shape = 'u32[]', space=smem, size = 0x4, offset = 0x4, fixed_abs, tag = 'smem constant byte address 0x4 - core index']
  #allocation1 [shape = 'u32[144,128]{1,0:T(1,128)}', space=vmem, size = 0x12000, scoped, tag = 'internal scratch']
  #allocation2 [shape = 'f32[128,128]{1,0:T(8,128)}', space=vmem, size = 0x10000, scoped, tag = 'scratch operand']
  %s0 = inlined_call_operand.vmem [shape: bf16[128,128], index: 0, kind: input, shape index: {}]
  %s1 = inlined_call_operand.vmem [shape: bf16[128,128], index: 1, kind: input, shape index: {}]
  %s2 = inlined_call_operand.vmem [shape: f32[1,128], index: 2, kind: input, shape index: {}]
  %s3 = inlined_call_operand.vmem [shape: f32[128,128], index: 3, kind: output, shape index: {}]
  %s4 = sld [smem:[#allocation0]]
  $region30: #{deeplabv3_forward.6} parent=0
    _
  %s6 = ssub.s32 1, %s4
  %s7 = scalar_select 0, %s6, %s4
  // Predicated region
  $region2: #{deeplabv3_forward.6} parent=0 // pred_check
    _
  $region3: #{deeplabv3_forward.6} parent=0 // pred_check_branch
    %9 = sbr.rel (0) target = $region5
  $region4: #{deeplabv3_forward.6} parent=0 // pred_region
    _
  $region5: #{deeplabv3_forward.6} parent=0 // pred_fallthru
    _
  // Predicated region
  $region6: #{deeplabv3_forward.6} parent=0 // pred_check
    _
  $region7: #{deeplabv3_forward.6} parent=0 // pred_check_branch
    %11 = sbr.rel (0) target = $region9
  $region8: #{deeplabv3_forward.6} parent=0 // pred_region
    _
  $region9: #{deeplabv3_forward.6} parent=0 // pred_fallthru
    _
  // Predicated region
  $region10: #{deeplabv3_forward.6} parent=0 // pred_check
    _
  $region11: #{deeplabv3_forward.6} parent=0 // pred_check_branch
    %13 = sbr.rel (0) target = $region13
  $region12: #{deeplabv3_forward.6} parent=0 // pred_region
    _
  $region13: #{deeplabv3_forward.6} parent=0 // pred_fallthru
    _
  %p15 = scmp.eq.s32.totalorder 0, 0
  // Predicated region
  $region14: #{deeplabv3_forward.6} parent=0 // pred_check
    %p16 = pneg %p15
  $region15: #{deeplabv3_forward.6} parent=0 // pred_check_branch
    %18 = sbr.rel (%p16) target = $region17
  $region16: #{deeplabv3_forward.6} parent=0 // pred_region
    %19 = vst [vmem:[#allocation2] sm:$0xff] 0.0
    %20 = vst [vmem:[#allocation2 + $0x8] sm:$0xff] 0.0
    %21 = vst [vmem:[#allocation2 + $0x10] sm:$0xff] 0.0
    %22 = vst [vmem:[#allocation2 + $0x18] sm:$0xff] 0.0
    %23 = vst [vmem:[#allocation2 + $0x20] sm:$0xff] 0.0
    %24 = vst [vmem:[#allocation2 + $0x28] sm:$0xff] 0.0
    %25 = vst [vmem:[#allocation2 + $0x30] sm:$0xff] 0.0
    %26 = vst [vmem:[#allocation2 + $0x38] sm:$0xff] 0.0
    %27 = vst [vmem:[#allocation2 + $0x40] sm:$0xff] 0.0
    %28 = vst [vmem:[#allocation2 + $0x48] sm:$0xff] 0.0
    %29 = vst [vmem:[#allocation2 + $0x50] sm:$0xff] 0.0
    %30 = vst [vmem:[#allocation2 + $0x58] sm:$0xff] 0.0
    %31 = vst [vmem:[#allocation2 + $0x60] sm:$0xff] 0.0
    %32 = vst [vmem:[#allocation2 + $0x68] sm:$0xff] 0.0
    %33 = vst [vmem:[#allocation2 + $0x70] sm:$0xff] 0.0
    %34 = vst [vmem:[#allocation2 + $0x78] sm:$0xff] 0.0
  $region17: #{deeplabv3_forward.6} parent=0 // pred_fallthru
    _
  %v35 = vld [vmem:[#allocation2] sm:$0xff]
  %v36 = vld [vmem:[#allocation2 + $0x8] sm:$0xff]
  %v37 = vld [vmem:[#allocation2 + $0x10] sm:$0xff]
  %v38 = vld [vmem:[#allocation2 + $0x18] sm:$0xff]
  %v39 = vld [vmem:[#allocation2 + $0x20] sm:$0xff]
  %v40 = vld [vmem:[#allocation2 + $0x28] sm:$0xff]
  %v41 = vld [vmem:[#allocation2 + $0x30] sm:$0xff]
  %v42 = vld [vmem:[#allocation2 + $0x38] sm:$0xff]
  %v43 = vld [vmem:[#allocation2 + $0x40] sm:$0xff]
  %v44 = vld [vmem:[#allocation2 + $0x48] sm:$0xff]
  %v45 = vld [vmem:[#allocation2 + $0x50] sm:$0xff]
  %v46 = vld [vmem:[#allocation2 + $0x58] sm:$0xff]
  %v47 = vld [vmem:[#allocation2 + $0x60] sm:$0xff]
  %v48 = vld [vmem:[#allocation2 + $0x68] sm:$0xff]
  %v49 = vld [vmem:[#allocation2 + $0x70] sm:$0xff]
  %v50 = vld [vmem:[#allocation2 + $0x78] sm:$0xff]
  %v51 = vld [vmem:[%s0] sm:$0xf]
  %v52 = vld [vmem:[%s0 + $0x4] sm:$0xf]
  %v53 = vld [vmem:[%s0 + $0x8] sm:$0xf]
  %v54 = vld [vmem:[%s0 + $0xc] sm:$0xf]
  %v55 = vld [vmem:[%s0 + $0x10] sm:$0xf]
  %v56 = vld [vmem:[%s0 + $0x14] sm:$0xf]
  %v57 = vld [vmem:[%s0 + $0x18] sm:$0xf]
  %v58 = vld [vmem:[%s0 + $0x1c] sm:$0xf]
  %v59 = vld [vmem:[%s0 + $0x20] sm:$0xf]
  %v60 = vld [vmem:[%s0 + $0x24] sm:$0xf]
  %v61 = vld [vmem:[%s0 + $0x28] sm:$0xf]
  %v62 = vld [vmem:[%s0 + $0x2c] sm:$0xf]
  %v63 = vld [vmem:[%s0 + $0x30] sm:$0xf]
  %v64 = vld [vmem:[%s0 + $0x34] sm:$0xf]
  %v65 = vld [vmem:[%s0 + $0x38] sm:$0xf]
  %v66 = vld [vmem:[%s0 + $0x3c] sm:$0xf]
  %v67 = vld [vmem:[%s1] sm:$0xf]
  %v68 = vld [vmem:[%s1 + $0x4] sm:$0xf]
  %v69 = vld [vmem:[%s1 + $0x8] sm:$0xf]
  %v70 = vld [vmem:[%s1 + $0xc] sm:$0xf]
  %v71 = vld [vmem:[%s1 + $0x10] sm:$0xf]
  %v72 = vld [vmem:[%s1 + $0x14] sm:$0xf]
  %v73 = vld [vmem:[%s1 + $0x18] sm:$0xf]
  %v74 = vld [vmem:[%s1 + $0x1c] sm:$0xf]
  %v75 = vld [vmem:[%s1 + $0x20] sm:$0xf]
  %v76 = vld [vmem:[%s1 + $0x24] sm:$0xf]
  %v77 = vld [vmem:[%s1 + $0x28] sm:$0xf]
  %v78 = vld [vmem:[%s1 + $0x2c] sm:$0xf]
  %v79 = vld [vmem:[%s1 + $0x30] sm:$0xf]
  %v80 = vld [vmem:[%s1 + $0x34] sm:$0xf]
  %v81 = vld [vmem:[%s1 + $0x38] sm:$0xf]
  %v82 = vld [vmem:[%s1 + $0x3c] sm:$0xf]
  %v99 = vunpack.c.l.b16 %v51
  %v100 = vunpack.c.l.b16 %v52
  %v101 = vunpack.c.l.b16 %v53
  %v102 = vunpack.c.l.b16 %v54
  %v103 = vunpack.c.l.b16 %v55
  %v104 = vunpack.c.l.b16 %v56
  %v105 = vunpack.c.l.b16 %v57
  %v106 = vunpack.c.l.b16 %v58
  %v107 = vunpack.c.l.b16 %v59
  %v108 = vunpack.c.l.b16 %v60
  %v109 = vunpack.c.l.b16 %v61
  %v110 = vunpack.c.l.b16 %v62
  %v111 = vunpack.c.l.b16 %v63
  %v112 = vunpack.c.l.b16 %v64
  %v113 = vunpack.c.l.b16 %v65
  %v114 = vunpack.c.l.b16 %v66
  %v115 = vpack.c.b16 %v100, %v99
  %v116 = vpack.c.b16 %v102, %v101
  %v117 = vpack.c.b16 %v104, %v103
  %v118 = vpack.c.b16 %v106, %v105
  %v119 = vpack.c.b16 %v108, %v107
  %v120 = vpack.c.b16 %v110, %v109
  %v121 = vpack.c.b16 %v112, %v111
  %v122 = vpack.c.b16 %v114, %v113
  %v147 = vunpack.c.l.b16 %v67
  %v148 = vunpack.c.l.b16 %v68
  %v149 = vunpack.c.l.b16 %v69
  %v150 = vunpack.c.l.b16 %v70
  %v151 = vunpack.c.l.b16 %v71
  %v152 = vunpack.c.l.b16 %v72
  %v153 = vunpack.c.l.b16 %v73
  %v154 = vunpack.c.l.b16 %v74
  %v155 = vunpack.c.l.b16 %v75
  %v156 = vunpack.c.l.b16 %v76
  %v157 = vunpack.c.l.b16 %v77
  %v158 = vunpack.c.l.b16 %v78
  %v159 = vunpack.c.l.b16 %v79
  %v160 = vunpack.c.l.b16 %v80
  %v161 = vunpack.c.l.b16 %v81
  %v162 = vunpack.c.l.b16 %v82
  %v163 = vpack.c.b16 %v148, %v147
  %v164 = vpack.c.b16 %v150, %v149
  %v165 = vpack.c.b16 %v152, %v151
  %v166 = vpack.c.b16 %v154, %v153
  %v167 = vpack.c.b16 %v156, %v155
  %v168 = vpack.c.b16 %v158, %v157
  %v169 = vpack.c.b16 %v160, %v159
  %v170 = vpack.c.b16 %v162, %v161
  %179 = vmatprep.subr.bf16.mxu0 0
  %180 = vmatpush1.bf16.msra.mxu0 %v170
  %181 = vmatprep.subr.bf16.mxu0 0
  %182 = vmatpush1.bf16.msra.mxu0 %v169
  %183 = vmatprep.subr.bf16.mxu0 0
  %184 = vmatpush1.bf16.msra.mxu0 %v168
  %185 = vmatprep.subr.bf16.mxu0 0
  %186 = vmatpush1.bf16.msra.mxu0 %v167
  %187 = vmatprep.subr.bf16.mxu0 0
  %188 = vmatpush1.bf16.msra.mxu0 %v166
  %189 = vmatprep.subr.bf16.mxu0 0
  %190 = vmatpush1.bf16.msra.mxu0 %v165
  %191 = vmatprep.subr.bf16.mxu0 0
  %192 = vmatpush1.bf16.msra.mxu0 %v164
  %193 = vmatprep.subr.bf16.mxu0 0
  %194 = vmatpush1.bf16.msra.mxu0 %v163
  %195 = vmatprep.subr.bf16.mxu0 0
  %196 = vmatpush2.bf16.msra.mxu0 0
  %197 = vmatprep.subr.bf16.mxu0 0
  %198 = vmatpush2.bf16.msra.mxu0 0
  %199 = vmatprep.subr.bf16.mxu0 0
  %200 = vmatpush2.bf16.msra.mxu0 0
  %201 = vmatprep.subr.bf16.mxu0 0
  %202 = vmatpush2.bf16.msra.mxu0 0
  %203 = vmatprep.subr.bf16.mxu0 0
  %204 = vmatpush2.bf16.msra.mxu0 0
  %205 = vmatprep.subr.bf16.mxu0 0
  %206 = vmatpush2.bf16.msra.mxu0 0
  %207 = vmatprep.subr.bf16.mxu0 0
  %208 = vmatpush2.bf16.msra.mxu0 0
  %209 = vmatprep.subr.bf16.mxu0 0
  %210 = vmatpush2.bf16.msra.mxu0 0
  %211 = vmatprep.mubr.bf16.mxu0 0
  %212 = vmatmul.mubr.bf16.gmra.mxu0 %v115
  %v213 = vpop.f32.mrf.mxu0
  %v214 = vadd.f32 0.0, %v213
  %v215 = vpop.f32.mrf.mxu0
  %v216 = vpop.f32.mrf.mxu0
  %v217 = vadd.f32 0.0, %v216
  %v218 = vpop.f32.mrf.mxu0
  %219 = vmatprep.mubr.bf16.mxu0 0
  %220 = vmatmul.mubr.bf16.gmra.mxu0 %v116
  %v221 = vpop.f32.mrf.mxu0
  %v222 = vadd.f32 0.0, %v221
  %v223 = vpop.f32.mrf.mxu0
  %v224 = vpop.f32.mrf.mxu0
  %v225 = vadd.f32 0.0, %v224
  %v226 = vpop.f32.mrf.mxu0
  %227 = vmatprep.mubr.bf16.mxu0 0
  %228 = vmatmul.mubr.bf16.gmra.mxu0 %v117
  %v229 = vpop.f32.mrf.mxu0
  %v230 = vadd.f32 0.0, %v229
  %v231 = vpop.f32.mrf.mxu0
  %v232 = vpop.f32.mrf.mxu0
  %v233 = vadd.f32 0.0, %v232
  %v234 = vpop.f32.mrf.mxu0
  %235 = vmatprep.mubr.bf16.mxu0 0
  %236 = vmatmul.mubr.bf16.gmra.mxu0 %v118
  %v237 = vpop.f32.mrf.mxu0
  %v238 = vadd.f32 0.0, %v237
  %v239 = vpop.f32.mrf.mxu0
  %v240 = vpop.f32.mrf.mxu0
  %v241 = vadd.f32 0.0, %v240
  %v242 = vpop.f32.mrf.mxu0
  %243 = vmatprep.mubr.bf16.mxu0 0
  %244 = vmatmul.mubr.bf16.gmra.mxu0 %v119
  %v245 = vpop.f32.mrf.mxu0
  %v246 = vadd.f32 0.0, %v245
  %v247 = vpop.f32.mrf.mxu0
  %v248 = vpop.f32.mrf.mxu0
  %v249 = vadd.f32 0.0, %v248
  %v250 = vpop.f32.mrf.mxu0
  %251 = vmatprep.mubr.bf16.mxu0 0
  %252 = vmatmul.mubr.bf16.gmra.mxu0 %v120
  %v253 = vpop.f32.mrf.mxu0
  %v254 = vadd.f32 0.0, %v253
  %v255 = vpop.f32.mrf.mxu0
  %v256 = vpop.f32.mrf.mxu0
  %v257 = vadd.f32 0.0, %v256
  %v258 = vpop.f32.mrf.mxu0
  %259 = vmatprep.mubr.bf16.mxu0 0
  %260 = vmatmul.mubr.bf16.gmra.mxu0 %v121
  %v261 = vpop.f32.mrf.mxu0
  %v262 = vadd.f32 0.0, %v261
  %v263 = vpop.f32.mrf.mxu0
  %v264 = vpop.f32.mrf.mxu0
  %v265 = vadd.f32 0.0, %v264
  %v266 = vpop.f32.mrf.mxu0
  %267 = vmatprep.mubr.bf16.mxu0 0
  %268 = vmatmul.mubr.bf16.gmra.mxu0 %v122
  %v269 = vpop.f32.mrf.mxu0
  %v270 = vadd.f32 0.0, %v269
  %v271 = vpop.f32.mrf.mxu0
  %v272 = vpop.f32.mrf.mxu0
  %v273 = vadd.f32 0.0, %v272
  %v274 = vpop.f32.mrf.mxu0
  %275 = vdwg.mxu0
  %v276 = vadd.f32 %v35, %v214
  %v277 = vadd.f32 %v36, %v217
  %v278 = vadd.f32 %v37, %v222
  %v279 = vadd.f32 %v38, %v225
  %v280 = vadd.f32 %v39, %v230
  %v281 = vadd.f32 %v40, %v233
  %v282 = vadd.f32 %v41, %v238
  %v283 = vadd.f32 %v42, %v241
  %v284 = vadd.f32 %v43, %v246
  %v285 = vadd.f32 %v44, %v249
  %v286 = vadd.f32 %v45, %v254
  %v287 = vadd.f32 %v46, %v257
  %v288 = vadd.f32 %v47, %v262
  %v289 = vadd.f32 %v48, %v265
  %v290 = vadd.f32 %v49, %v270
  %v291 = vadd.f32 %v50, %v273
  %292 = vst [vmem:[#allocation2] sm:$0xff] %v276
  %293 = vst [vmem:[#allocation2 + $0x8] sm:$0xff] %v277
  %294 = vst [vmem:[#allocation2 + $0x10] sm:$0xff] %v278
  %295 = vst [vmem:[#allocation2 + $0x18] sm:$0xff] %v279
  %296 = vst [vmem:[#allocation2 + $0x20] sm:$0xff] %v280
  %297 = vst [vmem:[#allocation2 + $0x28] sm:$0xff] %v281
  %298 = vst [vmem:[#allocation2 + $0x30] sm:$0xff] %v282
  %299 = vst [vmem:[#allocation2 + $0x38] sm:$0xff] %v283
  %300 = vst [vmem:[#allocation2 + $0x40] sm:$0xff] %v284
  %301 = vst [vmem:[#allocation2 + $0x48] sm:$0xff] %v285
  %302 = vst [vmem:[#allocation2 + $0x50] sm:$0xff] %v286
  %303 = vst [vmem:[#allocation2 + $0x58] sm:$0xff] %v287
  %304 = vst [vmem:[#allocation2 + $0x60] sm:$0xff] %v288
  %305 = vst [vmem:[#allocation2 + $0x68] sm:$0xff] %v289
  %306 = vst [vmem:[#allocation2 + $0x70] sm:$0xff] %v290
  %307 = vst [vmem:[#allocation2 + $0x78] sm:$0xff] %v291
  // Predicated region
  $region18: #{deeplabv3_forward.6} parent=0 // pred_check
    %p308 = pneg %p15
  $region19: #{deeplabv3_forward.6} parent=0 // pred_check_branch
    %310 = sbr.rel (%p308) target = $region21
  $region20: #{deeplabv3_forward.6} parent=0 // pred_region
    %v311 = vld [vmem:[#allocation2] sm:$0xff]
    %v312 = vld [vmem:[#allocation2 + $0x8] sm:$0xff]
    %v313 = vld [vmem:[#allocation2 + $0x10] sm:$0xff]
    %v314 = vld [vmem:[#allocation2 + $0x18] sm:$0xff]
    %v315 = vld [vmem:[#allocation2 + $0x20] sm:$0xff]
    %v316 = vld [vmem:[#allocation2 + $0x28] sm:$0xff]
    %v317 = vld [vmem:[#allocation2 + $0x30] sm:$0xff]
    %v318 = vld [vmem:[#allocation2 + $0x38] sm:$0xff]
    %v319 = vld [vmem:[#allocation2 + $0x40] sm:$0xff]
    %v320 = vld [vmem:[#allocation2 + $0x48] sm:$0xff]
    %v321 = vld [vmem:[#allocation2 + $0x50] sm:$0xff]
    %v322 = vld [vmem:[#allocation2 + $0x58] sm:$0xff]
    %v323 = vld [vmem:[#allocation2 + $0x60] sm:$0xff]
    %v324 = vld [vmem:[#allocation2 + $0x68] sm:$0xff]
    %v325 = vld [vmem:[#allocation2 + $0x70] sm:$0xff]
    %v326 = vld [vmem:[#allocation2 + $0x78] sm:$0xff]
    %v327 = vld [vmem:[%s2] sm:$0x1]
    %v329 = vlaneseq
    %v330 = vshrl.u32 %v329, 7
    %v331 = vsub.s32 0, %v330
    %v332 = vrot.slane %v327, %v331
    %v334 = vadd.f32 %v311, %v332
    %v335 = vadd.f32 %v312, %v332
    %v336 = vadd.f32 %v313, %v332
    %v337 = vadd.f32 %v314, %v332
    %v338 = vadd.f32 %v315, %v332
    %v339 = vadd.f32 %v316, %v332
    %v340 = vadd.f32 %v317, %v332
    %v341 = vadd.f32 %v318, %v332
    %v342 = vadd.f32 %v319, %v332
    %v343 = vadd.f32 %v320, %v332
    %v344 = vadd.f32 %v321, %v332
    %v345 = vadd.f32 %v322, %v332
    %v346 = vadd.f32 %v323, %v332
    %v347 = vadd.f32 %v324, %v332
    %v348 = vadd.f32 %v325, %v332
    %v349 = vadd.f32 %v326, %v332
    %v350 = vmax.f32 %v334, 0.0
    %v351 = vmax.f32 %v335, 0.0
    %v352 = vmax.f32 %v336, 0.0
    %v353 = vmax.f32 %v337, 0.0
    %v354 = vmax.f32 %v338, 0.0
    %v355 = vmax.f32 %v339, 0.0
    %v356 = vmax.f32 %v340, 0.0
    %v357 = vmax.f32 %v341, 0.0
    %v358 = vmax.f32 %v342, 0.0
    %v359 = vmax.f32 %v343, 0.0
    %v360 = vmax.f32 %v344, 0.0
    %v361 = vmax.f32 %v345, 0.0
    %v362 = vmax.f32 %v346, 0.0
    %v363 = vmax.f32 %v347, 0.0
    %v364 = vmax.f32 %v348, 0.0
    %v365 = vmax.f32 %v349, 0.0
    %366 = vst [vmem:[%s3] sm:$0xff] %v350
    %367 = vst [vmem:[%s3 + $0x8] sm:$0xff] %v351
    %368 = vst [vmem:[%s3 + $0x10] sm:$0xff] %v352
    %369 = vst [vmem:[%s3 + $0x18] sm:$0xff] %v353
    %370 = vst [vmem:[%s3 + $0x20] sm:$0xff] %v354
    %371 = vst [vmem:[%s3 + $0x28] sm:$0xff] %v355
    %372 = vst [vmem:[%s3 + $0x30] sm:$0xff] %v356
    %373 = vst [vmem:[%s3 + $0x38] sm:$0xff] %v357
    %374 = vst [vmem:[%s3 + $0x40] sm:$0xff] %v358
    %375 = vst [vmem:[%s3 + $0x48] sm:$0xff] %v359
    %376 = vst [vmem:[%s3 + $0x50] sm:$0xff] %v360
    %377 = vst [vmem:[%s3 + $0x58] sm:$0xff] %v361
    %378 = vst [vmem:[%s3 + $0x60] sm:$0xff] %v362
    %379 = vst [vmem:[%s3 + $0x68] sm:$0xff] %v363
    %380 = vst [vmem:[%s3 + $0x70] sm:$0xff] %v364
    %381 = vst [vmem:[%s3 + $0x78] sm:$0xff] %v365
  $region21: #{deeplabv3_forward.6} parent=0 // pred_fallthru
    _
  // Predicated region
  $region22: #{deeplabv3_forward.6} parent=0 // pred_check
    _
  $region23: #{deeplabv3_forward.6} parent=0 // pred_check_branch
    %383 = sbr.rel (0) target = $region25
  $region24: #{deeplabv3_forward.6} parent=0 // pred_region
    _
  $region25: #{deeplabv3_forward.6} parent=0 // pred_fallthru
    _
  // Predicated region
  $region26: #{deeplabv3_forward.6} parent=0 // pred_check
    _
  $region27: #{deeplabv3_forward.6} parent=0 // pred_check_branch
    %385 = sbr.rel (0) target = $region29
  $region28: #{deeplabv3_forward.6} parent=0 // pred_region
    _
  $region29: #{deeplabv3_forward.6} parent=0 // pred_fallthru
    _

// kernel: deeplabv3_forward.7
$region0: #{deeplabv3_forward.7}
  #allocation0 [shape = 'u32[]', space=smem, size = 0x4, offset = 0x4, fixed_abs, tag = 'smem constant byte address 0x4 - core index']
  #allocation1 [shape = 'u32[144,128]{1,0:T(1,128)}', space=vmem, size = 0x12000, scoped, tag = 'internal scratch']
  #allocation2 [shape = 'f32[32,128]{1,0:T(8,128)}', space=vmem, size = 0x4000, scoped, tag = 'scratch operand']
  %s0 = inlined_call_operand.vmem [shape: bf16[32,128], index: 0, kind: input, shape index: {}]
  %s1 = inlined_call_operand.vmem [shape: bf16[128,128], index: 1, kind: input, shape index: {}]
  %s2 = inlined_call_operand.vmem [shape: f32[1,128], index: 2, kind: input, shape index: {}]
  %s3 = inlined_call_operand.vmem [shape: f32[32,128], index: 3, kind: output, shape index: {}]
  %s4 = sld [smem:[#allocation0]]
  $region30: #{deeplabv3_forward.7} parent=0
    _
  %s6 = ssub.s32 1, %s4
  %s7 = scalar_select 0, %s6, %s4
  // Predicated region
  $region2: #{deeplabv3_forward.7} parent=0 // pred_check
    _
  $region3: #{deeplabv3_forward.7} parent=0 // pred_check_branch
    %9 = sbr.rel (0) target = $region5
  $region4: #{deeplabv3_forward.7} parent=0 // pred_region
    _
  $region5: #{deeplabv3_forward.7} parent=0 // pred_fallthru
    _
  // Predicated region
  $region6: #{deeplabv3_forward.7} parent=0 // pred_check
    _
  $region7: #{deeplabv3_forward.7} parent=0 // pred_check_branch
    %11 = sbr.rel (0) target = $region9
  $region8: #{deeplabv3_forward.7} parent=0 // pred_region
    _
  $region9: #{deeplabv3_forward.7} parent=0 // pred_fallthru
    _
  // Predicated region
  $region10: #{deeplabv3_forward.7} parent=0 // pred_check
    _
  $region11: #{deeplabv3_forward.7} parent=0 // pred_check_branch
    %13 = sbr.rel (0) target = $region13
  $region12: #{deeplabv3_forward.7} parent=0 // pred_region
    _
  $region13: #{deeplabv3_forward.7} parent=0 // pred_fallthru
    _
  %p15 = scmp.eq.s32.totalorder 0, 0
  // Predicated region
  $region14: #{deeplabv3_forward.7} parent=0 // pred_check
    %p16 = pneg %p15
  $region15: #{deeplabv3_forward.7} parent=0 // pred_check_branch
    %18 = sbr.rel (%p16) target = $region17
  $region16: #{deeplabv3_forward.7} parent=0 // pred_region
    %19 = vst [vmem:[#allocation2] sm:$0xff] 0.0
    %20 = vst [vmem:[#allocation2 + $0x8] sm:$0xff] 0.0
    %21 = vst [vmem:[#allocation2 + $0x10] sm:$0xff] 0.0
    %22 = vst [vmem:[#allocation2 + $0x18] sm:$0xff] 0.0
  $region17: #{deeplabv3_forward.7} parent=0 // pred_fallthru
    _
  %v23 = vld [vmem:[#allocation2] sm:$0xff]
  %v24 = vld [vmem:[#allocation2 + $0x8] sm:$0xff]
  %v25 = vld [vmem:[#allocation2 + $0x10] sm:$0xff]
  %v26 = vld [vmem:[#allocation2 + $0x18] sm:$0xff]
  %v27 = vld [vmem:[%s0] sm:$0xf]
  %v28 = vld [vmem:[%s0 + $0x4] sm:$0xf]
  %v29 = vld [vmem:[%s0 + $0x8] sm:$0xf]
  %v30 = vld [vmem:[%s0 + $0xc] sm:$0xf]
  %v31 = vld [vmem:[%s1] sm:$0xf]
  %v32 = vld [vmem:[%s1 + $0x4] sm:$0xf]
  %v33 = vld [vmem:[%s1 + $0x8] sm:$0xf]
  %v34 = vld [vmem:[%s1 + $0xc] sm:$0xf]
  %v35 = vld [vmem:[%s1 + $0x10] sm:$0xf]
  %v36 = vld [vmem:[%s1 + $0x14] sm:$0xf]
  %v37 = vld [vmem:[%s1 + $0x18] sm:$0xf]
  %v38 = vld [vmem:[%s1 + $0x1c] sm:$0xf]
  %v39 = vld [vmem:[%s1 + $0x20] sm:$0xf]
  %v40 = vld [vmem:[%s1 + $0x24] sm:$0xf]
  %v41 = vld [vmem:[%s1 + $0x28] sm:$0xf]
  %v42 = vld [vmem:[%s1 + $0x2c] sm:$0xf]
  %v43 = vld [vmem:[%s1 + $0x30] sm:$0xf]
  %v44 = vld [vmem:[%s1 + $0x34] sm:$0xf]
  %v45 = vld [vmem:[%s1 + $0x38] sm:$0xf]
  %v46 = vld [vmem:[%s1 + $0x3c] sm:$0xf]
  %v51 = vunpack.c.l.b16 %v27
  %v52 = vunpack.c.l.b16 %v28
  %v53 = vunpack.c.l.b16 %v29
  %v54 = vunpack.c.l.b16 %v30
  %v55 = vpack.c.b16 %v52, %v51
  %v56 = vpack.c.b16 %v54, %v53
  %v75 = vunpack.c.l.b16 %v31
  %v76 = vunpack.c.l.b16 %v32
  %v77 = vunpack.c.l.b16 %v33
  %v78 = vunpack.c.l.b16 %v34
  %v79 = vunpack.c.l.b16 %v35
  %v80 = vunpack.c.l.b16 %v36
  %v81 = vunpack.c.l.b16 %v37
  %v82 = vunpack.c.l.b16 %v38
  %v83 = vunpack.c.l.b16 %v39
  %v84 = vunpack.c.l.b16 %v40
  %v85 = vunpack.c.l.b16 %v41
  %v86 = vunpack.c.l.b16 %v42
  %v87 = vunpack.c.l.b16 %v43
  %v88 = vunpack.c.l.b16 %v44
  %v89 = vunpack.c.l.b16 %v45
  %v90 = vunpack.c.l.b16 %v46
  %v91 = vpack.c.b16 %v76, %v75
  %v92 = vpack.c.b16 %v78, %v77
  %v93 = vpack.c.b16 %v80, %v79
  %v94 = vpack.c.b16 %v82, %v81
  %v95 = vpack.c.b16 %v84, %v83
  %v96 = vpack.c.b16 %v86, %v85
  %v97 = vpack.c.b16 %v88, %v87
  %v98 = vpack.c.b16 %v90, %v89
  %107 = vmatprep.subr.bf16.mxu0 0
  %108 = vmatpush1.bf16.msra.mxu0 %v98
  %109 = vmatprep.subr.bf16.mxu0 0
  %110 = vmatpush1.bf16.msra.mxu0 %v97
  %111 = vmatprep.subr.bf16.mxu0 0
  %112 = vmatpush1.bf16.msra.mxu0 %v96
  %113 = vmatprep.subr.bf16.mxu0 0
  %114 = vmatpush1.bf16.msra.mxu0 %v95
  %115 = vmatprep.subr.bf16.mxu0 0
  %116 = vmatpush1.bf16.msra.mxu0 %v94
  %117 = vmatprep.subr.bf16.mxu0 0
  %118 = vmatpush1.bf16.msra.mxu0 %v93
  %119 = vmatprep.subr.bf16.mxu0 0
  %120 = vmatpush1.bf16.msra.mxu0 %v92
  %121 = vmatprep.subr.bf16.mxu0 0
  %122 = vmatpush1.bf16.msra.mxu0 %v91
  %123 = vmatprep.subr.bf16.mxu0 0
  %124 = vmatpush2.bf16.msra.mxu0 0
  %125 = vmatprep.subr.bf16.mxu0 0
  %126 = vmatpush2.bf16.msra.mxu0 0
  %127 = vmatprep.subr.bf16.mxu0 0
  %128 = vmatpush2.bf16.msra.mxu0 0
  %129 = vmatprep.subr.bf16.mxu0 0
  %130 = vmatpush2.bf16.msra.mxu0 0
  %131 = vmatprep.subr.bf16.mxu0 0
  %132 = vmatpush2.bf16.msra.mxu0 0
  %133 = vmatprep.subr.bf16.mxu0 0
  %134 = vmatpush2.bf16.msra.mxu0 0
  %135 = vmatprep.subr.bf16.mxu0 0
  %136 = vmatpush2.bf16.msra.mxu0 0
  %137 = vmatprep.subr.bf16.mxu0 0
  %138 = vmatpush2.bf16.msra.mxu0 0
  %139 = vmatprep.mubr.bf16.mxu0 0
  %140 = vmatmul.mubr.bf16.gmra.mxu0 %v55
  %v141 = vpop.f32.mrf.mxu0
  %v142 = vadd.f32 0.0, %v141
  %v143 = vpop.f32.mrf.mxu0
  %v144 = vpop.f32.mrf.mxu0
  %v145 = vadd.f32 0.0, %v144
  %v146 = vpop.f32.mrf.mxu0
  %147 = vmatprep.mubr.bf16.mxu0 0
  %148 = vmatmul.mubr.bf16.gmra.mxu0 %v56
  %v149 = vpop.f32.mrf.mxu0
  %v150 = vadd.f32 0.0, %v149
  %v151 = vpop.f32.mrf.mxu0
  %v152 = vpop.f32.mrf.mxu0
  %v153 = vadd.f32 0.0, %v152
  %v154 = vpop.f32.mrf.mxu0
  %155 = vdwg.mxu0
  %v156 = vadd.f32 %v23, %v142
  %v157 = vadd.f32 %v24, %v145
  %v158 = vadd.f32 %v25, %v150
  %v159 = vadd.f32 %v26, %v153
  %160 = vst [vmem:[#allocation2] sm:$0xff] %v156
  %161 = vst [vmem:[#allocation2 + $0x8] sm:$0xff] %v157
  %162 = vst [vmem:[#allocation2 + $0x10] sm:$0xff] %v158
  %163 = vst [vmem:[#allocation2 + $0x18] sm:$0xff] %v159
  // Predicated region
  $region18: #{deeplabv3_forward.7} parent=0 // pred_check
    %p164 = pneg %p15
  $region19: #{deeplabv3_forward.7} parent=0 // pred_check_branch
    %166 = sbr.rel (%p164) target = $region21
  $region20: #{deeplabv3_forward.7} parent=0 // pred_region
    %v167 = vld [vmem:[#allocation2] sm:$0xff]
    %v168 = vld [vmem:[#allocation2 + $0x8] sm:$0xff]
    %v169 = vld [vmem:[#allocation2 + $0x10] sm:$0xff]
    %v170 = vld [vmem:[#allocation2 + $0x18] sm:$0xff]
    %v171 = vld [vmem:[%s2] sm:$0x1]
    %v173 = vlaneseq
    %v174 = vshrl.u32 %v173, 7
    %v175 = vsub.s32 0, %v174
    %v176 = vrot.slane %v171, %v175
    %v178 = vadd.f32 %v167, %v176
    %v179 = vadd.f32 %v168, %v176
    %v180 = vadd.f32 %v169, %v176
    %v181 = vadd.f32 %v170, %v176
    %v182 = vmax.f32 %v178, 0.0
    %v183 = vmax.f32 %v179, 0.0
    %v184 = vmax.f32 %v180, 0.0
    %v185 = vmax.f32 %v181, 0.0
    %186 = vst [vmem:[%s3] sm:$0xff] %v182
    %187 = vst [vmem:[%s3 + $0x8] sm:$0xff] %v183
    %188 = vst [vmem:[%s3 + $0x10] sm:$0xff] %v184
    %189 = vst [vmem:[%s3 + $0x18] sm:$0xff] %v185
  $region21: #{deeplabv3_forward.7} parent=0 // pred_fallthru
    _
  // Predicated region
  $region22: #{deeplabv3_forward.7} parent=0 // pred_check
    _
  $region23: #{deeplabv3_forward.7} parent=0 // pred_check_branch
    %191 = sbr.rel (0) target = $region25
  $region24: #{deeplabv3_forward.7} parent=0 // pred_region
    _
  $region25: #{deeplabv3_forward.7} parent=0 // pred_fallthru
    _
  // Predicated region
  $region26: #{deeplabv3_forward.7} parent=0 // pred_check
    _
  $region27: #{deeplabv3_forward.7} parent=0 // pred_check_branch
    %193 = sbr.rel (0) target = $region29
  $region28: #{deeplabv3_forward.7} parent=0 // pred_region
    _
  $region29: #{deeplabv3_forward.7} parent=0 // pred_fallthru
    _

// kernel: deeplabv3_forward.9
$region0: #{deeplabv3_forward.9}
  #allocation0 [shape = 'u32[]', space=smem, size = 0x4, offset = 0x4, fixed_abs, tag = 'smem constant byte address 0x4 - core index']
  #allocation1 [shape = 'u32[144,128]{1,0:T(1,128)}', space=vmem, size = 0x12000, scoped, tag = 'internal scratch']
  #allocation2 [shape = 'f32[32,128]{1,0:T(8,128)}', space=vmem, size = 0x4000, scoped, tag = 'scratch operand']
  %s0 = inlined_call_operand.vmem [shape: bf16[32,128], index: 0, kind: input, shape index: {}]
  %s1 = inlined_call_operand.vmem [shape: bf16[128,128], index: 1, kind: input, shape index: {}]
  %s2 = inlined_call_operand.vmem [shape: f32[1,128], index: 2, kind: input, shape index: {}]
  %s3 = inlined_call_operand.vmem [shape: f32[32,128], index: 3, kind: output, shape index: {}]
  %s4 = sld [smem:[#allocation0]]
  $region30: #{deeplabv3_forward.9} parent=0
    _
  %s6 = ssub.s32 1, %s4
  %s7 = scalar_select 0, %s6, %s4
  // Predicated region
  $region2: #{deeplabv3_forward.9} parent=0 // pred_check
    _
  $region3: #{deeplabv3_forward.9} parent=0 // pred_check_branch
    %9 = sbr.rel (0) target = $region5
  $region4: #{deeplabv3_forward.9} parent=0 // pred_region
    _
  $region5: #{deeplabv3_forward.9} parent=0 // pred_fallthru
    _
  // Predicated region
  $region6: #{deeplabv3_forward.9} parent=0 // pred_check
    _
  $region7: #{deeplabv3_forward.9} parent=0 // pred_check_branch
    %11 = sbr.rel (0) target = $region9
  $region8: #{deeplabv3_forward.9} parent=0 // pred_region
    _
  $region9: #{deeplabv3_forward.9} parent=0 // pred_fallthru
    _
  // Predicated region
  $region10: #{deeplabv3_forward.9} parent=0 // pred_check
    _
  $region11: #{deeplabv3_forward.9} parent=0 // pred_check_branch
    %13 = sbr.rel (0) target = $region13
  $region12: #{deeplabv3_forward.9} parent=0 // pred_region
    _
  $region13: #{deeplabv3_forward.9} parent=0 // pred_fallthru
    _
  %p15 = scmp.eq.s32.totalorder 0, 0
  // Predicated region
  $region14: #{deeplabv3_forward.9} parent=0 // pred_check
    %p16 = pneg %p15
  $region15: #{deeplabv3_forward.9} parent=0 // pred_check_branch
    %18 = sbr.rel (%p16) target = $region17
  $region16: #{deeplabv3_forward.9} parent=0 // pred_region
    %19 = vst [vmem:[#allocation2] sm:$0xff] 0.0
    %20 = vst [vmem:[#allocation2 + $0x8] sm:$0xff] 0.0
    %21 = vst [vmem:[#allocation2 + $0x10] sm:$0xff] 0.0
    %22 = vst [vmem:[#allocation2 + $0x18] sm:$0xff] 0.0
  $region17: #{deeplabv3_forward.9} parent=0 // pred_fallthru
    _
  %v23 = vld [vmem:[#allocation2] sm:$0xff]
  %v24 = vld [vmem:[#allocation2 + $0x8] sm:$0xff]
  %v25 = vld [vmem:[#allocation2 + $0x10] sm:$0xff]
  %v26 = vld [vmem:[#allocation2 + $0x18] sm:$0xff]
  %v27 = vld [vmem:[%s0] sm:$0xf]
  %v28 = vld [vmem:[%s0 + $0x4] sm:$0xf]
  %v29 = vld [vmem:[%s0 + $0x8] sm:$0xf]
  %v30 = vld [vmem:[%s0 + $0xc] sm:$0xf]
  %v31 = vld [vmem:[%s1] sm:$0xf]
  %v32 = vld [vmem:[%s1 + $0x4] sm:$0xf]
  %v33 = vld [vmem:[%s1 + $0x8] sm:$0xf]
  %v34 = vld [vmem:[%s1 + $0xc] sm:$0xf]
  %v35 = vld [vmem:[%s1 + $0x10] sm:$0xf]
  %v36 = vld [vmem:[%s1 + $0x14] sm:$0xf]
  %v37 = vld [vmem:[%s1 + $0x18] sm:$0xf]
  %v38 = vld [vmem:[%s1 + $0x1c] sm:$0xf]
  %v39 = vld [vmem:[%s1 + $0x20] sm:$0xf]
  %v40 = vld [vmem:[%s1 + $0x24] sm:$0xf]
  %v41 = vld [vmem:[%s1 + $0x28] sm:$0xf]
  %v42 = vld [vmem:[%s1 + $0x2c] sm:$0xf]
  %v43 = vld [vmem:[%s1 + $0x30] sm:$0xf]
  %v44 = vld [vmem:[%s1 + $0x34] sm:$0xf]
  %v45 = vld [vmem:[%s1 + $0x38] sm:$0xf]
  %v46 = vld [vmem:[%s1 + $0x3c] sm:$0xf]
  %v51 = vunpack.c.l.b16 %v27
  %v52 = vunpack.c.l.b16 %v28
  %v53 = vunpack.c.l.b16 %v29
  %v54 = vunpack.c.l.b16 %v30
  %v55 = vpack.c.b16 %v52, %v51
  %v56 = vpack.c.b16 %v54, %v53
  %v75 = vunpack.c.l.b16 %v31
  %v76 = vunpack.c.l.b16 %v32
  %v77 = vunpack.c.l.b16 %v33
  %v78 = vunpack.c.l.b16 %v34
  %v79 = vunpack.c.l.b16 %v35
  %v80 = vunpack.c.l.b16 %v36
  %v81 = vunpack.c.l.b16 %v37
  %v82 = vunpack.c.l.b16 %v38
  %v83 = vunpack.c.l.b16 %v39
  %v84 = vunpack.c.l.b16 %v40
  %v85 = vunpack.c.l.b16 %v41
  %v86 = vunpack.c.l.b16 %v42
  %v87 = vunpack.c.l.b16 %v43
  %v88 = vunpack.c.l.b16 %v44
  %v89 = vunpack.c.l.b16 %v45
  %v90 = vunpack.c.l.b16 %v46
  %v91 = vpack.c.b16 %v76, %v75
  %v92 = vpack.c.b16 %v78, %v77
  %v93 = vpack.c.b16 %v80, %v79
  %v94 = vpack.c.b16 %v82, %v81
  %v95 = vpack.c.b16 %v84, %v83
  %v96 = vpack.c.b16 %v86, %v85
  %v97 = vpack.c.b16 %v88, %v87
  %v98 = vpack.c.b16 %v90, %v89
  %107 = vmatprep.subr.bf16.mxu0 0
  %108 = vmatpush1.bf16.msra.mxu0 %v98
  %109 = vmatprep.subr.bf16.mxu0 0
  %110 = vmatpush1.bf16.msra.mxu0 %v97
  %111 = vmatprep.subr.bf16.mxu0 0
  %112 = vmatpush1.bf16.msra.mxu0 %v96
  %113 = vmatprep.subr.bf16.mxu0 0
  %114 = vmatpush1.bf16.msra.mxu0 %v95
  %115 = vmatprep.subr.bf16.mxu0 0
  %116 = vmatpush1.bf16.msra.mxu0 %v94
  %117 = vmatprep.subr.bf16.mxu0 0
  %118 = vmatpush1.bf16.msra.mxu0 %v93
  %119 = vmatprep.subr.bf16.mxu0 0
  %120 = vmatpush1.bf16.msra.mxu0 %v92
  %121 = vmatprep.subr.bf16.mxu0 0
  %122 = vmatpush1.bf16.msra.mxu0 %v91
  %123 = vmatprep.subr.bf16.mxu0 0
  %124 = vmatpush2.bf16.msra.mxu0 0
  %125 = vmatprep.subr.bf16.mxu0 0
  %126 = vmatpush2.bf16.msra.mxu0 0
  %127 = vmatprep.subr.bf16.mxu0 0
  %128 = vmatpush2.bf16.msra.mxu0 0
  %129 = vmatprep.subr.bf16.mxu0 0
  %130 = vmatpush2.bf16.msra.mxu0 0
  %131 = vmatprep.subr.bf16.mxu0 0
  %132 = vmatpush2.bf16.msra.mxu0 0
  %133 = vmatprep.subr.bf16.mxu0 0
  %134 = vmatpush2.bf16.msra.mxu0 0
  %135 = vmatprep.subr.bf16.mxu0 0
  %136 = vmatpush2.bf16.msra.mxu0 0
  %137 = vmatprep.subr.bf16.mxu0 0
  %138 = vmatpush2.bf16.msra.mxu0 0
  %139 = vmatprep.mubr.bf16.mxu0 0
  %140 = vmatmul.mubr.bf16.gmra.mxu0 %v55
  %v141 = vpop.f32.mrf.mxu0
  %v142 = vadd.f32 0.0, %v141
  %v143 = vpop.f32.mrf.mxu0
  %v144 = vpop.f32.mrf.mxu0
  %v145 = vadd.f32 0.0, %v144
  %v146 = vpop.f32.mrf.mxu0
  %147 = vmatprep.mubr.bf16.mxu0 0
  %148 = vmatmul.mubr.bf16.gmra.mxu0 %v56
  %v149 = vpop.f32.mrf.mxu0
  %v150 = vadd.f32 0.0, %v149
  %v151 = vpop.f32.mrf.mxu0
  %v152 = vpop.f32.mrf.mxu0
  %v153 = vadd.f32 0.0, %v152
  %v154 = vpop.f32.mrf.mxu0
  %155 = vdwg.mxu0
  %v156 = vadd.f32 %v23, %v142
  %v157 = vadd.f32 %v24, %v145
  %v158 = vadd.f32 %v25, %v150
  %v159 = vadd.f32 %v26, %v153
  %160 = vst [vmem:[#allocation2] sm:$0xff] %v156
  %161 = vst [vmem:[#allocation2 + $0x8] sm:$0xff] %v157
  %162 = vst [vmem:[#allocation2 + $0x10] sm:$0xff] %v158
  %163 = vst [vmem:[#allocation2 + $0x18] sm:$0xff] %v159
  // Predicated region
  $region18: #{deeplabv3_forward.9} parent=0 // pred_check
    %p164 = pneg %p15
  $region19: #{deeplabv3_forward.9} parent=0 // pred_check_branch
    %166 = sbr.rel (%p164) target = $region21
  $region20: #{deeplabv3_forward.9} parent=0 // pred_region
    %v167 = vld [vmem:[#allocation2] sm:$0xff]
    %v168 = vld [vmem:[#allocation2 + $0x8] sm:$0xff]
    %v169 = vld [vmem:[#allocation2 + $0x10] sm:$0xff]
    %v170 = vld [vmem:[#allocation2 + $0x18] sm:$0xff]
    %v171 = vld [vmem:[%s2] sm:$0x1]
    %v173 = vlaneseq
    %v174 = vshrl.u32 %v173, 7
    %v175 = vsub.s32 0, %v174
    %v176 = vrot.slane %v171, %v175
    %v178 = vadd.f32 %v167, %v176
    %v179 = vadd.f32 %v168, %v176
    %v180 = vadd.f32 %v169, %v176
    %v181 = vadd.f32 %v170, %v176
    %182 = vst [vmem:[%s3] sm:$0xff] %v178
    %183 = vst [vmem:[%s3 + $0x8] sm:$0xff] %v179
    %184 = vst [vmem:[%s3 + $0x10] sm:$0xff] %v180
    %185 = vst [vmem:[%s3 + $0x18] sm:$0xff] %v181
  $region21: #{deeplabv3_forward.9} parent=0 // pred_fallthru
    _
  // Predicated region
  $region22: #{deeplabv3_forward.9} parent=0 // pred_check
    _
  $region23: #{deeplabv3_forward.9} parent=0 // pred_check_branch
    %187 = sbr.rel (0) target = $region25
  $region24: #{deeplabv3_forward.9} parent=0 // pred_region
    _
  $region25: #{deeplabv3_forward.9} parent=0 // pred_fallthru
    _
  // Predicated region
  $region26: #{deeplabv3_forward.9} parent=0 // pred_check
    _
  $region27: #{deeplabv3_forward.9} parent=0 // pred_check_branch
    %189 = sbr.rel (0) target = $region29
  $region28: #{deeplabv3_forward.9} parent=0 // pred_region
    _
  $region29: #{deeplabv3_forward.9} parent=0 // pred_fallthru
    _

// kernel: deeplabv3_forward.8
$region0: #{deeplabv3_forward.8}
  #allocation0 [shape = 'u32[]', space=smem, size = 0x4, offset = 0x4, fixed_abs, tag = 'smem constant byte address 0x4 - core index']
  #allocation1 [shape = 'u32[144,128]{1,0:T(1,128)}', space=vmem, size = 0x12000, scoped, tag = 'internal scratch']
  #allocation2 [shape = 'f32[32,128]{1,0:T(8,128)}', space=vmem, size = 0x4000, scoped, tag = 'scratch operand']
  %s0 = inlined_call_operand.vmem [shape: bf16[32,256], index: 0, kind: input, shape index: {}]
  %s1 = inlined_call_operand.vmem [shape: bf16[256,128], index: 1, kind: input, shape index: {}]
  %s2 = inlined_call_operand.vmem [shape: f32[1,128], index: 2, kind: input, shape index: {}]
  %s3 = inlined_call_operand.vmem [shape: f32[32,128], index: 3, kind: output, shape index: {}]
  %s4 = sld [smem:[#allocation0]]
  $region30: #{deeplabv3_forward.8} parent=0
    _
  %s6 = ssub.s32 1, %s4
  %s7 = scalar_select 0, %s6, %s4
  // Predicated region
  $region2: #{deeplabv3_forward.8} parent=0 // pred_check
    _
  $region3: #{deeplabv3_forward.8} parent=0 // pred_check_branch
    %9 = sbr.rel (0) target = $region5
  $region4: #{deeplabv3_forward.8} parent=0 // pred_region
    _
  $region5: #{deeplabv3_forward.8} parent=0 // pred_fallthru
    _
  // Predicated region
  $region6: #{deeplabv3_forward.8} parent=0 // pred_check
    _
  $region7: #{deeplabv3_forward.8} parent=0 // pred_check_branch
    %11 = sbr.rel (0) target = $region9
  $region8: #{deeplabv3_forward.8} parent=0 // pred_region
    _
  $region9: #{deeplabv3_forward.8} parent=0 // pred_fallthru
    _
  // Predicated region
  $region10: #{deeplabv3_forward.8} parent=0 // pred_check
    _
  $region11: #{deeplabv3_forward.8} parent=0 // pred_check_branch
    %13 = sbr.rel (0) target = $region13
  $region12: #{deeplabv3_forward.8} parent=0 // pred_region
    _
  $region13: #{deeplabv3_forward.8} parent=0 // pred_fallthru
    _
  %p15 = scmp.eq.s32.totalorder 0, 0
  // Predicated region
  $region14: #{deeplabv3_forward.8} parent=0 // pred_check
    %p16 = pneg %p15
  $region15: #{deeplabv3_forward.8} parent=0 // pred_check_branch
    %18 = sbr.rel (%p16) target = $region17
  $region16: #{deeplabv3_forward.8} parent=0 // pred_region
    %19 = vst [vmem:[#allocation2] sm:$0xff] 0.0
    %20 = vst [vmem:[#allocation2 + $0x8] sm:$0xff] 0.0
    %21 = vst [vmem:[#allocation2 + $0x10] sm:$0xff] 0.0
    %22 = vst [vmem:[#allocation2 + $0x18] sm:$0xff] 0.0
  $region17: #{deeplabv3_forward.8} parent=0 // pred_fallthru
    _
  %v23 = vld [vmem:[#allocation2] sm:$0xff]
  %v24 = vld [vmem:[#allocation2 + $0x8] sm:$0xff]
  %v25 = vld [vmem:[#allocation2 + $0x10] sm:$0xff]
  %v26 = vld [vmem:[#allocation2 + $0x18] sm:$0xff]
  %v27 = vld [vmem:[%s0] sm:$0xff]
  %v28 = vld [vmem:[%s0 + $0x8] sm:$0xff]
  %v29 = vld [vmem:[%s0 + $0x10] sm:$0xff]
  %v30 = vld [vmem:[%s0 + $0x18] sm:$0xff]
  %v31 = vld [vmem:[%s1] sm:$0xf]
  %v32 = vld [vmem:[%s1 + $0x4] sm:$0xf]
  %v33 = vld [vmem:[%s1 + $0x8] sm:$0xf]
  %v34 = vld [vmem:[%s1 + $0xc] sm:$0xf]
  %v35 = vld [vmem:[%s1 + $0x10] sm:$0xf]
  %v36 = vld [vmem:[%s1 + $0x14] sm:$0xf]
  %v37 = vld [vmem:[%s1 + $0x18] sm:$0xf]
  %v38 = vld [vmem:[%s1 + $0x1c] sm:$0xf]
  %v39 = vld [vmem:[%s1 + $0x20] sm:$0xf]
  %v40 = vld [vmem:[%s1 + $0x24] sm:$0xf]
  %v41 = vld [vmem:[%s1 + $0x28] sm:$0xf]
  %v42 = vld [vmem:[%s1 + $0x2c] sm:$0xf]
  %v43 = vld [vmem:[%s1 + $0x30] sm:$0xf]
  %v44 = vld [vmem:[%s1 + $0x34] sm:$0xf]
  %v45 = vld [vmem:[%s1 + $0x38] sm:$0xf]
  %v46 = vld [vmem:[%s1 + $0x3c] sm:$0xf]
  %v47 = vld [vmem:[%s1 + $0x40] sm:$0xf]
  %v48 = vld [vmem:[%s1 + $0x44] sm:$0xf]
  %v49 = vld [vmem:[%s1 + $0x48] sm:$0xf]
  %v50 = vld [vmem:[%s1 + $0x4c] sm:$0xf]
  %v51 = vld [vmem:[%s1 + $0x50] sm:$0xf]
  %v52 = vld [vmem:[%s1 + $0x54] sm:$0xf]
  %v53 = vld [vmem:[%s1 + $0x58] sm:$0xf]
  %v54 = vld [vmem:[%s1 + $0x5c] sm:$0xf]
  %v55 = vld [vmem:[%s1 + $0x60] sm:$0xf]
  %v56 = vld [vmem:[%s1 + $0x64] sm:$0xf]
  %v57 = vld [vmem:[%s1 + $0x68] sm:$0xf]
  %v58 = vld [vmem:[%s1 + $0x6c] sm:$0xf]
  %v59 = vld [vmem:[%s1 + $0x70] sm:$0xf]
  %v60 = vld [vmem:[%s1 + $0x74] sm:$0xf]
  %v61 = vld [vmem:[%s1 + $0x78] sm:$0xf]
  %v62 = vld [vmem:[%s1 + $0x7c] sm:$0xf]
  %v67 = vunpack.c.l.b16 %v27
  %v68 = vunpack.c.h.b16 %v27
  %v69 = vunpack.c.l.b16 %v28
  %v70 = vunpack.c.h.b16 %v28
  %v71 = vunpack.c.l.b16 %v29
  %v72 = vunpack.c.h.b16 %v29
  %v73 = vunpack.c.l.b16 %v30
  %v74 = vunpack.c.h.b16 %v30
  %v75 = vpack.c.b16 %v69, %v67
  %v76 = vpack.c.b16 %v70, %v68
  %v77 = vpack.c.b16 %v73, %v71
  %v78 = vpack.c.b16 %v74, %v72
  %v115 = vunpack.c.l.b16 %v31
  %v116 = vunpack.c.l.b16 %v32
  %v117 = vunpack.c.l.b16 %v33
  %v118 = vunpack.c.l.b16 %v34
  %v119 = vunpack.c.l.b16 %v35
  %v120 = vunpack.c.l.b16 %v36
  %v121 = vunpack.c.l.b16 %v37
  %v122 = vunpack.c.l.b16 %v38
  %v123 = vunpack.c.l.b16 %v39
  %v124 = vunpack.c.l.b16 %v40
  %v125 = vunpack.c.l.b16 %v41
  %v126 = vunpack.c.l.b16 %v42
  %v127 = vunpack.c.l.b16 %v43
  %v128 = vunpack.c.l.b16 %v44
  %v129 = vunpack.c.l.b16 %v45
  %v130 = vunpack.c.l.b16 %v46
  %v131 = vunpack.c.l.b16 %v47
  %v132 = vunpack.c.l.b16 %v48
  %v133 = vunpack.c.l.b16 %v49
  %v134 = vunpack.c.l.b16 %v50
  %v135 = vunpack.c.l.b16 %v51
  %v136 = vunpack.c.l.b16 %v52
  %v137 = vunpack.c.l.b16 %v53
  %v138 = vunpack.c.l.b16 %v54
  %v139 = vunpack.c.l.b16 %v55
  %v140 = vunpack.c.l.b16 %v56
  %v141 = vunpack.c.l.b16 %v57
  %v142 = vunpack.c.l.b16 %v58
  %v143 = vunpack.c.l.b16 %v59
  %v144 = vunpack.c.l.b16 %v60
  %v145 = vunpack.c.l.b16 %v61
  %v146 = vunpack.c.l.b16 %v62
  %v147 = vpack.c.b16 %v116, %v115
  %v148 = vpack.c.b16 %v118, %v117
  %v149 = vpack.c.b16 %v120, %v119
  %v150 = vpack.c.b16 %v122, %v121
  %v151 = vpack.c.b16 %v124, %v123
  %v152 = vpack.c.b16 %v126, %v125
  %v153 = vpack.c.b16 %v128, %v127
  %v154 = vpack.c.b16 %v130, %v129
  %v155 = vpack.c.b16 %v132, %v131
  %v156 = vpack.c.b16 %v134, %v133
  %v157 = vpack.c.b16 %v136, %v135
  %v158 = vpack.c.b16 %v138, %v137
  %v159 = vpack.c.b16 %v140, %v139
  %v160 = vpack.c.b16 %v142, %v141
  %v161 = vpack.c.b16 %v144, %v143
  %v162 = vpack.c.b16 %v146, %v145
  %179 = vmatprep.subr.bf16.mxu0 0
  %180 = vmatpush1.bf16.msra.mxu0 %v154
  %181 = vmatprep.subr.bf16.mxu0 0
  %182 = vmatpush1.bf16.msra.mxu0 %v153
  %183 = vmatprep.subr.bf16.mxu0 0
  %184 = vmatpush1.bf16.msra.mxu0 %v152
  %185 = vmatprep.subr.bf16.mxu0 0
  %186 = vmatpush1.bf16.msra.mxu0 %v151
  %187 = vmatprep.subr.bf16.mxu0 0
  %188 = vmatpush1.bf16.msra.mxu0 %v150
  %189 = vmatprep.subr.bf16.mxu0 0
  %190 = vmatpush1.bf16.msra.mxu0 %v149
  %191 = vmatprep.subr.bf16.mxu0 0
  %192 = vmatpush1.bf16.msra.mxu0 %v148
  %193 = vmatprep.subr.bf16.mxu0 0
  %194 = vmatpush1.bf16.msra.mxu0 %v147
  %195 = vmatprep.subr.bf16.mxu0 0
  %196 = vmatpush2.bf16.msra.mxu0 %v162
  %197 = vmatprep.subr.bf16.mxu0 0
  %198 = vmatpush2.bf16.msra.mxu0 %v161
  %199 = vmatprep.subr.bf16.mxu0 0
  %200 = vmatpush2.bf16.msra.mxu0 %v160
  %201 = vmatprep.subr.bf16.mxu0 0
  %202 = vmatpush2.bf16.msra.mxu0 %v159
  %203 = vmatprep.subr.bf16.mxu0 0
  %204 = vmatpush2.bf16.msra.mxu0 %v158
  %205 = vmatprep.subr.bf16.mxu0 0
  %206 = vmatpush2.bf16.msra.mxu0 %v157
  %207 = vmatprep.subr.bf16.mxu0 0
  %208 = vmatpush2.bf16.msra.mxu0 %v156
  %209 = vmatprep.subr.bf16.mxu0 0
  %210 = vmatpush2.bf16.msra.mxu0 %v155
  %211 = vmatprep.mubr.bf16.mxu0 %v76
  %212 = vmatmul.mubr.bf16.gmra.mxu0 %v75
  %v213 = vpop.f32.mrf.mxu0
  %v214 = vadd.f32 0.0, %v213
  %v215 = vpop.f32.mrf.mxu0
  %v216 = vpop.f32.mrf.mxu0
  %v217 = vadd.f32 0.0, %v216
  %v218 = vpop.f32.mrf.mxu0
  %219 = vmatprep.mubr.bf16.mxu0 %v78
  %220 = vmatmul.mubr.bf16.gmra.mxu0 %v77
  %v221 = vpop.f32.mrf.mxu0
  %v222 = vadd.f32 0.0, %v221
  %v223 = vpop.f32.mrf.mxu0
  %v224 = vpop.f32.mrf.mxu0
  %v225 = vadd.f32 0.0, %v224
  %v226 = vpop.f32.mrf.mxu0
  %227 = vdwg.mxu0
  %v228 = vadd.f32 %v23, %v214
  %v229 = vadd.f32 %v24, %v217
  %v230 = vadd.f32 %v25, %v222
  %v231 = vadd.f32 %v26, %v225
  %232 = vst [vmem:[#allocation2] sm:$0xff] %v228
  %233 = vst [vmem:[#allocation2 + $0x8] sm:$0xff] %v229
  %234 = vst [vmem:[#allocation2 + $0x10] sm:$0xff] %v230
  %235 = vst [vmem:[#allocation2 + $0x18] sm:$0xff] %v231
  // Predicated region
  $region18: #{deeplabv3_forward.8} parent=0 // pred_check
    %p236 = pneg %p15
  $region19: #{deeplabv3_forward.8} parent=0 // pred_check_branch
    %238 = sbr.rel (%p236) target = $region21
  $region20: #{deeplabv3_forward.8} parent=0 // pred_region
    %v239 = vld [vmem:[#allocation2] sm:$0xff]
    %v240 = vld [vmem:[#allocation2 + $0x8] sm:$0xff]
    %v241 = vld [vmem:[#allocation2 + $0x10] sm:$0xff]
    %v242 = vld [vmem:[#allocation2 + $0x18] sm:$0xff]
    %v243 = vld [vmem:[%s2] sm:$0x1]
    %v245 = vlaneseq
    %v246 = vshrl.u32 %v245, 7
    %v247 = vsub.s32 0, %v246
    %v248 = vrot.slane %v243, %v247
    %v250 = vadd.f32 %v239, %v248
    %v251 = vadd.f32 %v240, %v248
    %v252 = vadd.f32 %v241, %v248
    %v253 = vadd.f32 %v242, %v248
    %v254 = vmax.f32 %v250, 0.0
    %v255 = vmax.f32 %v251, 0.0
    %v256 = vmax.f32 %v252, 0.0
    %v257 = vmax.f32 %v253, 0.0
    %258 = vst [vmem:[%s3] sm:$0xff] %v254
    %259 = vst [vmem:[%s3 + $0x8] sm:$0xff] %v255
    %260 = vst [vmem:[%s3 + $0x10] sm:$0xff] %v256
    %261 = vst [vmem:[%s3 + $0x18] sm:$0xff] %v257
  $region21: #{deeplabv3_forward.8} parent=0 // pred_fallthru
    _
  // Predicated region
  $region22: #{deeplabv3_forward.8} parent=0 // pred_check
    _
  $region23: #{deeplabv3_forward.8} parent=0 // pred_check_branch
    %263 = sbr.rel (0) target = $region25
  $region24: #{deeplabv3_forward.8} parent=0 // pred_region
    _
  $region25: #{deeplabv3_forward.8} parent=0 // pred_fallthru
    _
  // Predicated region
  $region26: #{deeplabv3_forward.8} parent=0 // pred_check
    _
  $region27: #{deeplabv3_forward.8} parent=0 // pred_check_branch
    %265 = sbr.rel (0) target = $region29
  $region28: #{deeplabv3_forward.8} parent=0 // pred_region
    _
  $region29: #{deeplabv3_forward.8} parent=0 // pred_fallthru
    _

// kernel: deeplabv3_forward.10
$region0: #{deeplabv3_forward.10}
  #allocation0 [shape = 'u32[]', space=smem, size = 0x4, offset = 0x4, fixed_abs, tag = 'smem constant byte address 0x4 - core index']
  #allocation1 [shape = 'u32[144,128]{1,0:T(1,128)}', space=vmem, size = 0x12000, scoped, tag = 'internal scratch']
  #allocation2 [shape = 'f32[16,128]{1,0:T(8,128)}', space=vmem, size = 0x2000, scoped, tag = 'scratch operand']
  %s0 = inlined_call_operand.vmem [shape: bf16[16,128], index: 0, kind: input, shape index: {}]
  %s1 = inlined_call_operand.vmem [shape: bf16[128,128], index: 1, kind: input, shape index: {}]
  %s2 = inlined_call_operand.vmem [shape: f32[16,128], index: 2, kind: output, shape index: {}]
  %s3 = sld [smem:[#allocation0]]
  $region26: #{deeplabv3_forward.10} parent=0
    _
  %s5 = ssub.s32 1, %s3
  %s6 = scalar_select 0, %s5, %s3
  // Predicated region
  $region2: #{deeplabv3_forward.10} parent=0 // pred_check
    _
  $region3: #{deeplabv3_forward.10} parent=0 // pred_check_branch
    %8 = sbr.rel (0) target = $region5
  $region4: #{deeplabv3_forward.10} parent=0 // pred_region
    _
  $region5: #{deeplabv3_forward.10} parent=0 // pred_fallthru
    _
  // Predicated region
  $region6: #{deeplabv3_forward.10} parent=0 // pred_check
    _
  $region7: #{deeplabv3_forward.10} parent=0 // pred_check_branch
    %10 = sbr.rel (0) target = $region9
  $region8: #{deeplabv3_forward.10} parent=0 // pred_region
    _
  $region9: #{deeplabv3_forward.10} parent=0 // pred_fallthru
    _
  %p12 = scmp.eq.s32.totalorder 0, 0
  // Predicated region
  $region10: #{deeplabv3_forward.10} parent=0 // pred_check
    %p13 = pneg %p12
  $region11: #{deeplabv3_forward.10} parent=0 // pred_check_branch
    %15 = sbr.rel (%p13) target = $region13
  $region12: #{deeplabv3_forward.10} parent=0 // pred_region
    %16 = vst [vmem:[#allocation2] sm:$0xff] 0.0
    %17 = vst [vmem:[#allocation2 + $0x8] sm:$0xff] 0.0
  $region13: #{deeplabv3_forward.10} parent=0 // pred_fallthru
    _
  %v18 = vld [vmem:[#allocation2] sm:$0xff]
  %v19 = vld [vmem:[#allocation2 + $0x8] sm:$0xff]
  %v20 = vld [vmem:[%s0] sm:$0xf]
  %v21 = vld [vmem:[%s0 + $0x4] sm:$0xf]
  %v22 = vld [vmem:[%s1] sm:$0xf]
  %v23 = vld [vmem:[%s1 + $0x4] sm:$0xf]
  %v24 = vld [vmem:[%s1 + $0x8] sm:$0xf]
  %v25 = vld [vmem:[%s1 + $0xc] sm:$0xf]
  %v26 = vld [vmem:[%s1 + $0x10] sm:$0xf]
  %v27 = vld [vmem:[%s1 + $0x14] sm:$0xf]
  %v28 = vld [vmem:[%s1 + $0x18] sm:$0xf]
  %v29 = vld [vmem:[%s1 + $0x1c] sm:$0xf]
  %v30 = vld [vmem:[%s1 + $0x20] sm:$0xf]
  %v31 = vld [vmem:[%s1 + $0x24] sm:$0xf]
  %v32 = vld [vmem:[%s1 + $0x28] sm:$0xf]
  %v33 = vld [vmem:[%s1 + $0x2c] sm:$0xf]
  %v34 = vld [vmem:[%s1 + $0x30] sm:$0xf]
  %v35 = vld [vmem:[%s1 + $0x34] sm:$0xf]
  %v36 = vld [vmem:[%s1 + $0x38] sm:$0xf]
  %v37 = vld [vmem:[%s1 + $0x3c] sm:$0xf]
  %v40 = vunpack.c.l.b16 %v20
  %v41 = vunpack.c.l.b16 %v21
  %v42 = vpack.c.b16 %v41, %v40
  %v60 = vunpack.c.l.b16 %v22
  %v61 = vunpack.c.l.b16 %v23
  %v62 = vunpack.c.l.b16 %v24
  %v63 = vunpack.c.l.b16 %v25
  %v64 = vunpack.c.l.b16 %v26
  %v65 = vunpack.c.l.b16 %v27
  %v66 = vunpack.c.l.b16 %v28
  %v67 = vunpack.c.l.b16 %v29
  %v68 = vunpack.c.l.b16 %v30
  %v69 = vunpack.c.l.b16 %v31
  %v70 = vunpack.c.l.b16 %v32
  %v71 = vunpack.c.l.b16 %v33
  %v72 = vunpack.c.l.b16 %v34
  %v73 = vunpack.c.l.b16 %v35
  %v74 = vunpack.c.l.b16 %v36
  %v75 = vunpack.c.l.b16 %v37
  %v76 = vpack.c.b16 %v61, %v60
  %v77 = vpack.c.b16 %v63, %v62
  %v78 = vpack.c.b16 %v65, %v64
  %v79 = vpack.c.b16 %v67, %v66
  %v80 = vpack.c.b16 %v69, %v68
  %v81 = vpack.c.b16 %v71, %v70
  %v82 = vpack.c.b16 %v73, %v72
  %v83 = vpack.c.b16 %v75, %v74
  %92 = vmatprep.subr.bf16.mxu0 0
  %93 = vmatpush1.bf16.msra.mxu0 %v83
  %94 = vmatprep.subr.bf16.mxu0 0
  %95 = vmatpush1.bf16.msra.mxu0 %v82
  %96 = vmatprep.subr.bf16.mxu0 0
  %97 = vmatpush1.bf16.msra.mxu0 %v81
  %98 = vmatprep.subr.bf16.mxu0 0
  %99 = vmatpush1.bf16.msra.mxu0 %v80
  %100 = vmatprep.subr.bf16.mxu0 0
  %101 = vmatpush1.bf16.msra.mxu0 %v79
  %102 = vmatprep.subr.bf16.mxu0 0
  %103 = vmatpush1.bf16.msra.mxu0 %v78
  %104 = vmatprep.subr.bf16.mxu0 0
  %105 = vmatpush1.bf16.msra.mxu0 %v77
  %106 = vmatprep.subr.bf16.mxu0 0
  %107 = vmatpush1.bf16.msra.mxu0 %v76
  %108 = vmatprep.subr.bf16.mxu0 0
  %109 = vmatpush2.bf16.msra.mxu0 0
  %110 = vmatprep.subr.bf16.mxu0 0
  %111 = vmatpush2.bf16.msra.mxu0 0
  %112 = vmatprep.subr.bf16.mxu0 0
  %113 = vmatpush2.bf16.msra.mxu0 0
  %114 = vmatprep.subr.bf16.mxu0 0
  %115 = vmatpush2.bf16.msra.mxu0 0
  %116 = vmatprep.subr.bf16.mxu0 0
  %117 = vmatpush2.bf16.msra.mxu0 0
  %118 = vmatprep.subr.bf16.mxu0 0
  %119 = vmatpush2.bf16.msra.mxu0 0
  %120 = vmatprep.subr.bf16.mxu0 0
  %121 = vmatpush2.bf16.msra.mxu0 0
  %122 = vmatprep.subr.bf16.mxu0 0
  %123 = vmatpush2.bf16.msra.mxu0 0
  %124 = vmatprep.mubr.bf16.mxu0 0
  %125 = vmatmul.mubr.bf16.gmra.mxu0 %v42
  %v126 = vpop.f32.mrf.mxu0
  %v127 = vadd.f32 0.0, %v126
  %v128 = vpop.f32.mrf.mxu0
  %v129 = vpop.f32.mrf.mxu0
  %v130 = vadd.f32 0.0, %v129
  %v131 = vpop.f32.mrf.mxu0
  %132 = vdwg.mxu0
  %v133 = vadd.f32 %v18, %v127
  %v134 = vadd.f32 %v19, %v130
  %135 = vst [vmem:[#allocation2] sm:$0xff] %v133
  %136 = vst [vmem:[#allocation2 + $0x8] sm:$0xff] %v134
  // Predicated region
  $region14: #{deeplabv3_forward.10} parent=0 // pred_check
    %p137 = pneg %p12
  $region15: #{deeplabv3_forward.10} parent=0 // pred_check_branch
    %139 = sbr.rel (%p137) target = $region17
  $region16: #{deeplabv3_forward.10} parent=0 // pred_region
    %v140 = vld [vmem:[#allocation2] sm:$0xff]
    %v141 = vld [vmem:[#allocation2 + $0x8] sm:$0xff]
    %142 = vst [vmem:[%s2] sm:$0xff] %v140
    %143 = vst [vmem:[%s2 + $0x8] sm:$0xff] %v141
  $region17: #{deeplabv3_forward.10} parent=0 // pred_fallthru
    _
  // Predicated region
  $region18: #{deeplabv3_forward.10} parent=0 // pred_check
    _
  $region19: #{deeplabv3_forward.10} parent=0 // pred_check_branch
    %145 = sbr.rel (0) target = $region21
  $region20: #{deeplabv3_forward.10} parent=0 // pred_region
    _
  $region21: #{deeplabv3_forward.10} parent=0 // pred_fallthru
    _
  // Predicated region
  $region22: #{deeplabv3_forward.10} parent=0 // pred_check
    _
  $region23: #{deeplabv3_forward.10} parent=0 // pred_check_branch
    %147 = sbr.rel (0) target = $region25
  $region24: #{deeplabv3_forward.10} parent=0 // pred_region
    _
  $region25: #{deeplabv3_forward.10} parent=0 // pred_fallthru
    _

</llo_original>
